<compile_context>
chip_gen: v5e
topology: v5e:2x2
jax: 0.10.0
libtpu: 0.0.40
codegen_flags: <defaults>
</compile_context>

<pallas_src>
import functools

import jax
import jax.numpy as jnp
import numpy as np
from jax.experimental import pallas as pl
from jax.experimental.pallas import tpu as pltpu

PAD = 128      # lane-dense channel padding
EPS = 1e-5     # BatchNorm1d eps (torch default)


# ---------------------------------------------------------------------------
# Fused kernel: encoder (3 blocks) -> fused message passing -> decoder (3 blocks)
# ---------------------------------------------------------------------------
def encoder_decoder_kernel(x_ref, a_ref, wg_ref, bg_ref, gamma_ref, beta_ref,
                           wr_ref, br_ref, wmp_ref, bmp_ref, o_ref, *, eps):
    a = a_ref[...]                                    # (N, N) normalized adjacency

    def gcn(x, w, b):
        h = jnp.dot(x, w, preferred_element_type=jnp.float32)
        return jnp.dot(a, h, preferred_element_type=jnp.float32) + b

    def block(x, k):
        # GCNConv
        h = gcn(x, wg_ref[k], bg_ref[k])
        # BatchNorm1d (training-mode batch stats over nodes, biased variance)
        mean = jnp.mean(h, axis=0, keepdims=True)
        cen = h - mean
        var = jnp.mean(cen * cen, axis=0, keepdims=True)
        hn = cen * jax.lax.rsqrt(var + eps) * gamma_ref[k] + beta_ref[k]
        # residual (identity blocks use a padded identity matrix -> exact)
        res = jnp.dot(x, wr_ref[k], preferred_element_type=jnp.float32) + br_ref[k]
        return jnp.maximum(hn, 0.0) + res

    x = x_ref[...]

    # Encoder
    e1 = block(x, 0)
    e2 = block(e1, 1)
    e3 = block(e2, 2)

    # Fused message passing:
    #   MP1(e1) + MP2(e2) + MP3(e3) = A @ (e1 W1 + e2 W2 + e3 W3) + (b1+b2+b3)
    h = (jnp.dot(e1, wmp_ref[0], preferred_element_type=jnp.float32)
         + jnp.dot(e2, wmp_ref[1], preferred_element_type=jnp.float32)
         + jnp.dot(e3, wmp_ref[2], preferred_element_type=jnp.float32))
    d0 = jnp.dot(a, h, preferred_element_type=jnp.float32) + bmp_ref[...]

    # Decoder
    d1 = block(d0, 3)
    d2 = block(d1, 4)
    d3 = block(d2, 5)

    o_ref[...] = d3.astype(o_ref.dtype)


def _zero_map(nd):
    return lambda i: (0,) * nd


def encoder_decoder_pallas(xp, a_hat, packed, *, eps=EPS):
    """xp: [N, PAD] channel-padded node features; a_hat: [N, N]; packed: stacked params."""
    n = xp.shape[0]
    args = (xp, a_hat, packed["Wg"], packed["bg"], packed["gamma"],
            packed["beta"], packed["Wr"], packed["br"],
            packed["Wmp"], packed["bmp"])
    kern = functools.partial(encoder_decoder_kernel, eps=eps)
    return pl.pallas_call(
        kern,
        out_shape=jax.ShapeDtypeStruct((n, PAD), jnp.float32),
        grid=(1,),   # everything fits comfortably in VMEM at demo scale
        in_specs=[pl.BlockSpec(a.shape, _zero_map(a.ndim)) for a in args],
        out_specs=pl.BlockSpec((n, PAD), lambda i: (0, 0)),
        compiler_params=pltpu.CompilerParams(
            dimension_semantics=("arbitrary",)),
    )(*args)


# ---------------------------------------------------------------------------
# Graph preprocessing (plain-JAX glue): PyG-style gcn_norm with self-loops
# ---------------------------------------------------------------------------
def build_normalized_adjacency(edge_index, n):
    src, tgt = edge_index[0], edge_index[1]
    a = jnp.zeros((n, n), jnp.float32).at[tgt, src].add(1.0)   # row = target
    a = a + jnp.eye(n, dtype=jnp.float32)                      # add_self_loops
    deg = jnp.sum(a, axis=1)                                   # in-degree + 1
    dinv = jax.lax.rsqrt(deg)
    return a * dinv[:, None] * dinv[None, :]


# ---------------------------------------------------------------------------
# Parameters (real, unpadded) + packing into padded/stacked kernel inputs
# ---------------------------------------------------------------------------
def init_linear(key, fan_in, fan_out):
    kw, kb = jax.random.split(key)
    s = 1.0 / np.sqrt(fan_in)
    w = jax.random.uniform(kw, (fan_in, fan_out), jnp.float32, -s, s)
    b = jax.random.uniform(kb, (1, fan_out), jnp.float32, -s, s)
    return w, b


def init_gcn(key, fan_in, fan_out):
    # TODO(synk): PyG GCNConv uses glorot weights / zero bias; exact init
    # distributions don't affect forward semantics since weights are inputs.
    return init_linear(key, fan_in, fan_out)


def init_block(key, cin, cout):
    k1, k2 = jax.random.split(key)
    wg, bg = init_gcn(k1, cin, cout)
    p = dict(Wg=wg, bg=bg,
             gamma=jnp.ones((1, cout), jnp.float32),
             beta=jnp.zeros((1, cout), jnp.float32))
    if cin != cout:
        p["Wr"], p["br"] = init_linear(k2, cin, cout)   # nn.Linear residual
    else:
        p["Wr"], p["br"] = None, None                   # Identity residual
    return p


def init_params(key, input_dim, hidden_dim, output_dim):
    ks = jax.random.split(key, 9)
    enc = [init_block(ks[0], input_dim, hidden_dim),
           init_block(ks[1], hidden_dim, hidden_dim),
           init_block(ks[2], hidden_dim, hidden_dim)]
    mp = [init_gcn(ks[3], hidden_dim, hidden_dim),
          init_gcn(ks[4], hidden_dim, hidden_dim),
          init_gcn(ks[5], hidden_dim, hidden_dim)]
    dec = [init_block(ks[6], hidden_dim, hidden_dim),
           init_block(ks[7], hidden_dim, output_dim),
           init_block(ks[8], output_dim, output_dim)]
    return dict(enc=enc, mp=mp, dec=dec)


def pad2(w, rows, cols):
    out = jnp.zeros((rows, cols), jnp.float32)
    return out.at[: w.shape[0], : w.shape[1]].set(w)


def pack_params(params):
    """Zero-pad every weight to [PAD, PAD] / [1, PAD] and stack per-layer."""
    blocks = params["enc"] + params["dec"]   # usage order: enc1..3, dec1..3
    wg = jnp.stack([pad2(p["Wg"], PAD, PAD) for p in blocks])
    bg = jnp.stack([pad2(p["bg"], 1, PAD) for p in blocks])
    gamma = jnp.stack([pad2(p["gamma"], 1, PAD) for p in blocks])
    beta = jnp.stack([pad2(p["beta"], 1, PAD) for p in blocks])
    wr = jnp.stack([jnp.eye(PAD, dtype=jnp.float32) if p["Wr"] is None
                    else pad2(p["Wr"], PAD, PAD) for p in blocks])
    br = jnp.stack([jnp.zeros((1, PAD), jnp.float32) if p["br"] is None
                    else pad2(p["br"], 1, PAD) for p in blocks])
    wmp = jnp.stack([pad2(w, PAD, PAD) for (w, _) in params["mp"]])
    bmp = sum(pad2(b, 1, PAD) for (_, b) in params["mp"])
    return dict(Wg=wg, bg=bg, gamma=gamma, beta=beta, Wr=wr, br=br,
                Wmp=wmp, bmp=bmp)


# ---------------------------------------------------------------------------
# Pure-JAX reference (literal module structure, unpadded) for sanity checking
# ---------------------------------------------------------------------------
def gcn_ref(x, a_hat, w, b):
    return a_hat @ (x @ w) + b


def block_ref(x, a_hat, p, eps=EPS):
    h = gcn_ref(x, a_hat, p["Wg"], p["bg"])
    mean = h.mean(axis=0, keepdims=True)
    var = ((h - mean) ** 2).mean(axis=0, keepdims=True)
    hn = (h - mean) / jnp.sqrt(var + eps) * p["gamma"] + p["beta"]
    res = x if p["Wr"] is None else x @ p["Wr"] + p["br"]
    return jax.nn.relu(hn) + res


def ref_forward(x, a_hat, params):
    e1 = block_ref(x, a_hat, params["enc"][0])
    e2 = block_ref(e1, a_hat, params["enc"][1])
    e3 = block_ref(e2, a_hat, params["enc"][2])
    m = (gcn_ref(e1, a_hat, *params["mp"][0])
         + gcn_ref(e2, a_hat, *params["mp"][1])
         + gcn_ref(e3, a_hat, *params["mp"][2]))
    d1 = block_ref(m, a_hat, params["dec"][0])
    d2 = block_ref(d1, a_hat, params["dec"][1])
    d3 = block_ref(d2, a_hat, params["dec"][2])
    return d3


# ---------------------------------------------------------------------------
if __name__ == "__main__":
    key = jax.random.PRNGKey(0)
    N = 64
    input_dim, hidden_dim, output_dim = 8, 32, 16

    k_x, k_e, k_p = jax.random.split(key, 3)
    x = jax.random.normal(k_x, (N, input_dim), jnp.float32)

    # Deterministic edge list: ring + skip-5 ring + 64 pseudo-random edges.
    # edge_index = [source, target] (PyG convention).
    ring_src = jnp.arange(N, dtype=jnp.int32)
    ring_tgt = (ring_src + 1) % N
    skip_tgt = (ring_src + 5) % N
    rnd_src = jax.random.randint(k_e, (64,), 0, N, jnp.int32)
    rnd_tgt = (rnd_src * 7 + 3) % N
    edge_index = jnp.stack([jnp.concatenate([ring_src, ring_src, rnd_src]),
                            jnp.concatenate([ring_tgt, skip_tgt, rnd_tgt])])

    a_hat = build_normalized_adjacency(edge_index, N)
    params = init_params(k_p, input_dim, hidden_dim, output_dim)
    packed = pack_params(params)

    xp = pad2(x, N, PAD)   # zero-pad channels to 128 lanes (lane-dense I/O)

    fwd = jax.jit(lambda xp_, a_, pk_: encoder_decoder_pallas(xp_, a_, pk_))
    out_padded = jax.block_until_ready(fwd(xp, a_hat, packed))
    out = out_padded[:, :output_dim]

    ref = ref_forward(x, a_hat, params)
    np.testing.assert_allclose(np.asarray(out), np.asarray(ref),
                               rtol=2e-2, atol=2e-3)
    print("KERNEL_OK")
</pallas_src>

<mosaic_0001>
module attributes {stable_mosaic.version = 11 : i64} {
  func.func @encoder_decoder_kernel(%arg0: i32, %arg1: memref<64x128xf32, #tpu.memory_space<vmem>>, %arg2: memref<64x64xf32, #tpu.memory_space<vmem>>, %arg3: memref<6x128x128xf32, #tpu.memory_space<vmem>>, %arg4: memref<6x1x128xf32, #tpu.memory_space<vmem>>, %arg5: memref<6x1x128xf32, #tpu.memory_space<vmem>>, %arg6: memref<6x1x128xf32, #tpu.memory_space<vmem>>, %arg7: memref<6x128x128xf32, #tpu.memory_space<vmem>>, %arg8: memref<6x1x128xf32, #tpu.memory_space<vmem>>, %arg9: memref<3x128x128xf32, #tpu.memory_space<vmem>>, %arg10: memref<1x128xf32, #tpu.memory_space<vmem>>, %arg11: memref<64x128xf32, #tpu.memory_space<vmem>>) attributes {dimension_semantics = [#tpu.dimension_semantics<arbitrary>], iteration_bounds = array<i64: 1>, scalar_prefetch = 0 : i64, scratch_operands = 0 : i64, tpu.core_type = #tpu.core_type<tc>, window_params = [{pipeline_mode = #tpu.pipeline_mode<synchronous>, transform_indices = @transform_0, window_bounds = array<i64: 64, 128>}, {pipeline_mode = #tpu.pipeline_mode<synchronous>, transform_indices = @transform_1, window_bounds = array<i64: 64, 64>}, {pipeline_mode = #tpu.pipeline_mode<synchronous>, transform_indices = @transform_2, window_bounds = array<i64: 6, 128, 128>}, {pipeline_mode = #tpu.pipeline_mode<synchronous>, transform_indices = @transform_3, window_bounds = array<i64: 6, 1, 128>}, {pipeline_mode = #tpu.pipeline_mode<synchronous>, transform_indices = @transform_4, window_bounds = array<i64: 6, 1, 128>}, {pipeline_mode = #tpu.pipeline_mode<synchronous>, transform_indices = @transform_5, window_bounds = array<i64: 6, 1, 128>}, {pipeline_mode = #tpu.pipeline_mode<synchronous>, transform_indices = @transform_6, window_bounds = array<i64: 6, 128, 128>}, {pipeline_mode = #tpu.pipeline_mode<synchronous>, transform_indices = @transform_7, window_bounds = array<i64: 6, 1, 128>}, {pipeline_mode = #tpu.pipeline_mode<synchronous>, transform_indices = @transform_8, window_bounds = array<i64: 3, 128, 128>}, {pipeline_mode = #tpu.pipeline_mode<synchronous>, transform_indices = @transform_9, window_bounds = array<i64: 1, 128>}, {pipeline_mode = #tpu.pipeline_mode<synchronous>, transform_indices = @transform_10, window_bounds = array<i64: 64, 128>}]} {
    %c0 = arith.constant 0 : index
    %c0_0 = arith.constant 0 : index
    %0 = vector.load %arg2[%c0, %c0_0] : memref<64x64xf32, #tpu.memory_space<vmem>>, vector<64x64xf32>
    %c0_1 = arith.constant 0 : index
    %c0_2 = arith.constant 0 : index
    %1 = vector.load %arg1[%c0_1, %c0_2] : memref<64x128xf32, #tpu.memory_space<vmem>>, vector<64x128xf32>
    %c0_3 = arith.constant 0 : index
    %c0_4 = arith.constant 0 : index
    %c0_5 = arith.constant 0 : index
    %2 = vector.load %arg3[%c0_3, %c0_4, %c0_5] : memref<6x128x128xf32, #tpu.memory_space<vmem>>, vector<1x128x128xf32>
    %3 = vector.shape_cast %2 : vector<1x128x128xf32> to vector<128x128xf32>
    %c0_6 = arith.constant 0 : index
    %c0_7 = arith.constant 0 : index
    %c0_8 = arith.constant 0 : index
    %4 = vector.load %arg4[%c0_6, %c0_7, %c0_8] : memref<6x1x128xf32, #tpu.memory_space<vmem>>, vector<1x1x128xf32>
    %5 = vector.shape_cast %4 : vector<1x1x128xf32> to vector<1x128xf32>
    %cst = arith.constant dense<0.000000e+00> : vector<64x128xf32>
    %6 = tpu.matmul %1, %3, %cst {dimension_numbers = #tpu.dot_dimension_numbers<[1], [0], [0], [1], [0, 0, 1, 1], [], []>} : vector<64x128xf32>, vector<128x128xf32>, vector<64x128xf32> -> vector<64x128xf32>
    %cst_9 = arith.constant dense<0.000000e+00> : vector<64x128xf32>
    %7 = tpu.matmul %0, %6, %cst_9 {dimension_numbers = #tpu.dot_dimension_numbers<[1], [0], [0], [1], [0, 0, 1, 1], [], []>} : vector<64x64xf32>, vector<64x128xf32>, vector<64x128xf32> -> vector<64x128xf32>
    %8 = vector.broadcast %5 : vector<1x128xf32> to vector<64x128xf32>
    %9 = arith.addf %7, %8 : vector<64x128xf32>
    %cst_10 = arith.constant dense<0.000000e+00> : vector<128xf32>
    %10 = vector.multi_reduction <add>, %9, %cst_10 [0] : vector<64x128xf32> to vector<128xf32>
    %11 = vector.shape_cast %10 : vector<128xf32> to vector<1x128xf32>
    %cst_11 = arith.constant 6.400000e+01 : f32
    %12 = vector.broadcast %cst_11 : f32 to vector<1x128xf32>
    %13 = arith.divf %11, %12 : vector<1x128xf32>
    %14 = vector.broadcast %13 : vector<1x128xf32> to vector<64x128xf32>
    %15 = arith.subf %9, %14 : vector<64x128xf32>
    %16 = arith.mulf %15, %15 : vector<64x128xf32>
    %cst_12 = arith.constant dense<0.000000e+00> : vector<128xf32>
    %17 = vector.multi_reduction <add>, %16, %cst_12 [0] : vector<64x128xf32> to vector<128xf32>
    %18 = vector.shape_cast %17 : vector<128xf32> to vector<1x128xf32>
    %cst_13 = arith.constant 6.400000e+01 : f32
    %19 = vector.broadcast %cst_13 : f32 to vector<1x128xf32>
    %20 = arith.divf %18, %19 : vector<1x128xf32>
    %cst_14 = arith.constant 9.99999974E-6 : f32
    %21 = vector.broadcast %cst_14 : f32 to vector<1x128xf32>
    %22 = arith.addf %20, %21 : vector<1x128xf32>
    %23 = math.rsqrt %22 : vector<1x128xf32>
    %24 = vector.broadcast %23 : vector<1x128xf32> to vector<64x128xf32>
    %25 = arith.mulf %15, %24 : vector<64x128xf32>
    %c0_15 = arith.constant 0 : index
    %c0_16 = arith.constant 0 : index
    %c0_17 = arith.constant 0 : index
    %26 = vector.load %arg5[%c0_15, %c0_16, %c0_17] : memref<6x1x128xf32, #tpu.memory_space<vmem>>, vector<1x1x128xf32>
    %27 = vector.shape_cast %26 : vector<1x1x128xf32> to vector<1x128xf32>
    %28 = vector.broadcast %27 : vector<1x128xf32> to vector<64x128xf32>
    %29 = arith.mulf %25, %28 : vector<64x128xf32>
    %c0_18 = arith.constant 0 : index
    %c0_19 = arith.constant 0 : index
    %c0_20 = arith.constant 0 : index
    %30 = vector.load %arg6[%c0_18, %c0_19, %c0_20] : memref<6x1x128xf32, #tpu.memory_space<vmem>>, vector<1x1x128xf32>
    %31 = vector.shape_cast %30 : vector<1x1x128xf32> to vector<1x128xf32>
    %32 = vector.broadcast %31 : vector<1x128xf32> to vector<64x128xf32>
    %33 = arith.addf %29, %32 : vector<64x128xf32>
    %c0_21 = arith.constant 0 : index
    %c0_22 = arith.constant 0 : index
    %c0_23 = arith.constant 0 : index
    %34 = vector.load %arg7[%c0_21, %c0_22, %c0_23] : memref<6x128x128xf32, #tpu.memory_space<vmem>>, vector<1x128x128xf32>
    %35 = vector.shape_cast %34 : vector<1x128x128xf32> to vector<128x128xf32>
    %cst_24 = arith.constant dense<0.000000e+00> : vector<64x128xf32>
    %36 = tpu.matmul %1, %35, %cst_24 {dimension_numbers = #tpu.dot_dimension_numbers<[1], [0], [0], [1], [0, 0, 1, 1], [], []>} : vector<64x128xf32>, vector<128x128xf32>, vector<64x128xf32> -> vector<64x128xf32>
    %c0_25 = arith.constant 0 : index
    %c0_26 = arith.constant 0 : index
    %c0_27 = arith.constant 0 : index
    %37 = vector.load %arg8[%c0_25, %c0_26, %c0_27] : memref<6x1x128xf32, #tpu.memory_space<vmem>>, vector<1x1x128xf32>
    %38 = vector.shape_cast %37 : vector<1x1x128xf32> to vector<1x128xf32>
    %39 = vector.broadcast %38 : vector<1x128xf32> to vector<64x128xf32>
    %40 = arith.addf %36, %39 : vector<64x128xf32>
    %cst_28 = arith.constant 0.000000e+00 : f32
    %41 = vector.broadcast %cst_28 : f32 to vector<64x128xf32>
    %42 = arith.maximumf %33, %41 : vector<64x128xf32>
    %43 = arith.addf %42, %40 : vector<64x128xf32>
    %c1 = arith.constant 1 : index
    %c0_29 = arith.constant 0 : index
    %c0_30 = arith.constant 0 : index
    %44 = vector.load %arg3[%c1, %c0_29, %c0_30] : memref<6x128x128xf32, #tpu.memory_space<vmem>>, vector<1x128x128xf32>
    %45 = vector.shape_cast %44 : vector<1x128x128xf32> to vector<128x128xf32>
    %c1_31 = arith.constant 1 : index
    %c0_32 = arith.constant 0 : index
    %c0_33 = arith.constant 0 : index
    %46 = vector.load %arg4[%c1_31, %c0_32, %c0_33] : memref<6x1x128xf32, #tpu.memory_space<vmem>>, vector<1x1x128xf32>
    %47 = vector.shape_cast %46 : vector<1x1x128xf32> to vector<1x128xf32>
    %cst_34 = arith.constant dense<0.000000e+00> : vector<64x128xf32>
    %48 = tpu.matmul %43, %45, %cst_34 {dimension_numbers = #tpu.dot_dimension_numbers<[1], [0], [0], [1], [0, 0, 1, 1], [], []>} : vector<64x128xf32>, vector<128x128xf32>, vector<64x128xf32> -> vector<64x128xf32>
    %cst_35 = arith.constant dense<0.000000e+00> : vector<64x128xf32>
    %49 = tpu.matmul %0, %48, %cst_35 {dimension_numbers = #tpu.dot_dimension_numbers<[1], [0], [0], [1], [0, 0, 1, 1], [], []>} : vector<64x64xf32>, vector<64x128xf32>, vector<64x128xf32> -> vector<64x128xf32>
    %50 = vector.broadcast %47 : vector<1x128xf32> to vector<64x128xf32>
    %51 = arith.addf %49, %50 : vector<64x128xf32>
    %cst_36 = arith.constant dense<0.000000e+00> : vector<128xf32>
    %52 = vector.multi_reduction <add>, %51, %cst_36 [0] : vector<64x128xf32> to vector<128xf32>
    %53 = vector.shape_cast %52 : vector<128xf32> to vector<1x128xf32>
    %cst_37 = arith.constant 6.400000e+01 : f32
    %54 = vector.broadcast %cst_37 : f32 to vector<1x128xf32>
    %55 = arith.divf %53, %54 : vector<1x128xf32>
    %56 = vector.broadcast %55 : vector<1x128xf32> to vector<64x128xf32>
    %57 = arith.subf %51, %56 : vector<64x128xf32>
    %58 = arith.mulf %57, %57 : vector<64x128xf32>
    %cst_38 = arith.constant dense<0.000000e+00> : vector<128xf32>
    %59 = vector.multi_reduction <add>, %58, %cst_38 [0] : vector<64x128xf32> to vector<128xf32>
    %60 = vector.shape_cast %59 : vector<128xf32> to vector<1x128xf32>
    %cst_39 = arith.constant 6.400000e+01 : f32
    %61 = vector.broadcast %cst_39 : f32 to vector<1x128xf32>
    %62 = arith.divf %60, %61 : vector<1x128xf32>
    %cst_40 = arith.constant 9.99999974E-6 : f32
    %63 = vector.broadcast %cst_40 : f32 to vector<1x128xf32>
    %64 = arith.addf %62, %63 : vector<1x128xf32>
    %65 = math.rsqrt %64 : vector<1x128xf32>
    %66 = vector.broadcast %65 : vector<1x128xf32> to vector<64x128xf32>
    %67 = arith.mulf %57, %66 : vector<64x128xf32>
    %c1_41 = arith.constant 1 : index
    %c0_42 = arith.constant 0 : index
    %c0_43 = arith.constant 0 : index
    %68 = vector.load %arg5[%c1_41, %c0_42, %c0_43] : memref<6x1x128xf32, #tpu.memory_space<vmem>>, vector<1x1x128xf32>
    %69 = vector.shape_cast %68 : vector<1x1x128xf32> to vector<1x128xf32>
    %70 = vector.broadcast %69 : vector<1x128xf32> to vector<64x128xf32>
    %71 = arith.mulf %67, %70 : vector<64x128xf32>
    %c1_44 = arith.constant 1 : index
    %c0_45 = arith.constant 0 : index
    %c0_46 = arith.constant 0 : index
    %72 = vector.load %arg6[%c1_44, %c0_45, %c0_46] : memref<6x1x128xf32, #tpu.memory_space<vmem>>, vector<1x1x128xf32>
    %73 = vector.shape_cast %72 : vector<1x1x128xf32> to vector<1x128xf32>
    %74 = vector.broadcast %73 : vector<1x128xf32> to vector<64x128xf32>
    %75 = arith.addf %71, %74 : vector<64x128xf32>
    %c1_47 = arith.constant 1 : index
    %c0_48 = arith.constant 0 : index
    %c0_49 = arith.constant 0 : index
    %76 = vector.load %arg7[%c1_47, %c0_48, %c0_49] : memref<6x128x128xf32, #tpu.memory_space<vmem>>, vector<1x128x128xf32>
    %77 = vector.shape_cast %76 : vector<1x128x128xf32> to vector<128x128xf32>
    %cst_50 = arith.constant dense<0.000000e+00> : vector<64x128xf32>
    %78 = tpu.matmul %43, %77, %cst_50 {dimension_numbers = #tpu.dot_dimension_numbers<[1], [0], [0], [1], [0, 0, 1, 1], [], []>} : vector<64x128xf32>, vector<128x128xf32>, vector<64x128xf32> -> vector<64x128xf32>
    %c1_51 = arith.constant 1 : index
    %c0_52 = arith.constant 0 : index
    %c0_53 = arith.constant 0 : index
    %79 = vector.load %arg8[%c1_51, %c0_52, %c0_53] : memref<6x1x128xf32, #tpu.memory_space<vmem>>, vector<1x1x128xf32>
    %80 = vector.shape_cast %79 : vector<1x1x128xf32> to vector<1x128xf32>
    %81 = vector.broadcast %80 : vector<1x128xf32> to vector<64x128xf32>
    %82 = arith.addf %78, %81 : vector<64x128xf32>
    %cst_54 = arith.constant 0.000000e+00 : f32
    %83 = vector.broadcast %cst_54 : f32 to vector<64x128xf32>
    %84 = arith.maximumf %75, %83 : vector<64x128xf32>
    %85 = arith.addf %84, %82 : vector<64x128xf32>
    %c2 = arith.constant 2 : index
    %c0_55 = arith.constant 0 : index
    %c0_56 = arith.constant 0 : index
    %86 = vector.load %arg3[%c2, %c0_55, %c0_56] : memref<6x128x128xf32, #tpu.memory_space<vmem>>, vector<1x128x128xf32>
    %87 = vector.shape_cast %86 : vector<1x128x128xf32> to vector<128x128xf32>
    %c2_57 = arith.constant 2 : index
    %c0_58 = arith.constant 0 : index
    %c0_59 = arith.constant 0 : index
    %88 = vector.load %arg4[%c2_57, %c0_58, %c0_59] : memref<6x1x128xf32, #tpu.memory_space<vmem>>, vector<1x1x128xf32>
    %89 = vector.shape_cast %88 : vector<1x1x128xf32> to vector<1x128xf32>
    %cst_60 = arith.constant dense<0.000000e+00> : vector<64x128xf32>
    %90 = tpu.matmul %85, %87, %cst_60 {dimension_numbers = #tpu.dot_dimension_numbers<[1], [0], [0], [1], [0, 0, 1, 1], [], []>} : vector<64x128xf32>, vector<128x128xf32>, vector<64x128xf32> -> vector<64x128xf32>
    %cst_61 = arith.constant dense<0.000000e+00> : vector<64x128xf32>
    %91 = tpu.matmul %0, %90, %cst_61 {dimension_numbers = #tpu.dot_dimension_numbers<[1], [0], [0], [1], [0, 0, 1, 1], [], []>} : vector<64x64xf32>, vector<64x128xf32>, vector<64x128xf32> -> vector<64x128xf32>
    %92 = vector.broadcast %89 : vector<1x128xf32> to vector<64x128xf32>
    %93 = arith.addf %91, %92 : vector<64x128xf32>
    %cst_62 = arith.constant dense<0.000000e+00> : vector<128xf32>
    %94 = vector.multi_reduction <add>, %93, %cst_62 [0] : vector<64x128xf32> to vector<128xf32>
    %95 = vector.shape_cast %94 : vector<128xf32> to vector<1x128xf32>
    %cst_63 = arith.constant 6.400000e+01 : f32
    %96 = vector.broadcast %cst_63 : f32 to vector<1x128xf32>
    %97 = arith.divf %95, %96 : vector<1x128xf32>
    %98 = vector.broadcast %97 : vector<1x128xf32> to vector<64x128xf32>
    %99 = arith.subf %93, %98 : vector<64x128xf32>
    %100 = arith.mulf %99, %99 : vector<64x128xf32>
    %cst_64 = arith.constant dense<0.000000e+00> : vector<128xf32>
    %101 = vector.multi_reduction <add>, %100, %cst_64 [0] : vector<64x128xf32> to vector<128xf32>
    %102 = vector.shape_cast %101 : vector<128xf32> to vector<1x128xf32>
    %cst_65 = arith.constant 6.400000e+01 : f32
    %103 = vector.broadcast %cst_65 : f32 to vector<1x128xf32>
    %104 = arith.divf %102, %103 : vector<1x128xf32>
    %cst_66 = arith.constant 9.99999974E-6 : f32
    %105 = vector.broadcast %cst_66 : f32 to vector<1x128xf32>
    %106 = arith.addf %104, %105 : vector<1x128xf32>
    %107 = math.rsqrt %106 : vector<1x128xf32>
    %108 = vector.broadcast %107 : vector<1x128xf32> to vector<64x128xf32>
    %109 = arith.mulf %99, %108 : vector<64x128xf32>
    %c2_67 = arith.constant 2 : index
    %c0_68 = arith.constant 0 : index
    %c0_69 = arith.constant 0 : index
    %110 = vector.load %arg5[%c2_67, %c0_68, %c0_69] : memref<6x1x128xf32, #tpu.memory_space<vmem>>, vector<1x1x128xf32>
    %111 = vector.shape_cast %110 : vector<1x1x128xf32> to vector<1x128xf32>
    %112 = vector.broadcast %111 : vector<1x128xf32> to vector<64x128xf32>
    %113 = arith.mulf %109, %112 : vector<64x128xf32>
    %c2_70 = arith.constant 2 : index
    %c0_71 = arith.constant 0 : index
    %c0_72 = arith.constant 0 : index
    %114 = vector.load %arg6[%c2_70, %c0_71, %c0_72] : memref<6x1x128xf32, #tpu.memory_space<vmem>>, vector<1x1x128xf32>
    %115 = vector.shape_cast %114 : vector<1x1x128xf32> to vector<1x128xf32>
    %116 = vector.broadcast %115 : vector<1x128xf32> to vector<64x128xf32>
    %117 = arith.addf %113, %116 : vector<64x128xf32>
    %c2_73 = arith.constant 2 : index
    %c0_74 = arith.constant 0 : index
    %c0_75 = arith.constant 0 : index
    %118 = vector.load %arg7[%c2_73, %c0_74, %c0_75] : memref<6x128x128xf32, #tpu.memory_space<vmem>>, vector<1x128x128xf32>
    %119 = vector.shape_cast %118 : vector<1x128x128xf32> to vector<128x128xf32>
    %cst_76 = arith.constant dense<0.000000e+00> : vector<64x128xf32>
    %120 = tpu.matmul %85, %119, %cst_76 {dimension_numbers = #tpu.dot_dimension_numbers<[1], [0], [0], [1], [0, 0, 1, 1], [], []>} : vector<64x128xf32>, vector<128x128xf32>, vector<64x128xf32> -> vector<64x128xf32>
    %c2_77 = arith.constant 2 : index
    %c0_78 = arith.constant 0 : index
    %c0_79 = arith.constant 0 : index
    %121 = vector.load %arg8[%c2_77, %c0_78, %c0_79] : memref<6x1x128xf32, #tpu.memory_space<vmem>>, vector<1x1x128xf32>
    %122 = vector.shape_cast %121 : vector<1x1x128xf32> to vector<1x128xf32>
    %123 = vector.broadcast %122 : vector<1x128xf32> to vector<64x128xf32>
    %124 = arith.addf %120, %123 : vector<64x128xf32>
    %cst_80 = arith.constant 0.000000e+00 : f32
    %125 = vector.broadcast %cst_80 : f32 to vector<64x128xf32>
    %126 = arith.maximumf %117, %125 : vector<64x128xf32>
    %127 = arith.addf %126, %124 : vector<64x128xf32>
    %c0_81 = arith.constant 0 : index
    %c0_82 = arith.constant 0 : index
    %c0_83 = arith.constant 0 : index
    %128 = vector.load %arg9[%c0_81, %c0_82, %c0_83] : memref<3x128x128xf32, #tpu.memory_space<vmem>>, vector<1x128x128xf32>
    %129 = vector.shape_cast %128 : vector<1x128x128xf32> to vector<128x128xf32>
    %cst_84 = arith.constant dense<0.000000e+00> : vector<64x128xf32>
    %130 = tpu.matmul %43, %129, %cst_84 {dimension_numbers = #tpu.dot_dimension_numbers<[1], [0], [0], [1], [0, 0, 1, 1], [], []>} : vector<64x128xf32>, vector<128x128xf32>, vector<64x128xf32> -> vector<64x128xf32>
    %c1_85 = arith.constant 1 : index
    %c0_86 = arith.constant 0 : index
    %c0_87 = arith.constant 0 : index
    %131 = vector.load %arg9[%c1_85, %c0_86, %c0_87] : memref<3x128x128xf32, #tpu.memory_space<vmem>>, vector<1x128x128xf32>
    %132 = vector.shape_cast %131 : vector<1x128x128xf32> to vector<128x128xf32>
    %cst_88 = arith.constant dense<0.000000e+00> : vector<64x128xf32>
    %133 = tpu.matmul %85, %132, %cst_88 {dimension_numbers = #tpu.dot_dimension_numbers<[1], [0], [0], [1], [0, 0, 1, 1], [], []>} : vector<64x128xf32>, vector<128x128xf32>, vector<64x128xf32> -> vector<64x128xf32>
    %134 = arith.addf %130, %133 : vector<64x128xf32>
    %c2_89 = arith.constant 2 : index
    %c0_90 = arith.constant 0 : index
    %c0_91 = arith.constant 0 : index
    %135 = vector.load %arg9[%c2_89, %c0_90, %c0_91] : memref<3x128x128xf32, #tpu.memory_space<vmem>>, vector<1x128x128xf32>
    %136 = vector.shape_cast %135 : vector<1x128x128xf32> to vector<128x128xf32>
    %cst_92 = arith.constant dense<0.000000e+00> : vector<64x128xf32>
    %137 = tpu.matmul %127, %136, %cst_92 {dimension_numbers = #tpu.dot_dimension_numbers<[1], [0], [0], [1], [0, 0, 1, 1], [], []>} : vector<64x128xf32>, vector<128x128xf32>, vector<64x128xf32> -> vector<64x128xf32>
    %138 = arith.addf %134, %137 : vector<64x128xf32>
    %cst_93 = arith.constant dense<0.000000e+00> : vector<64x128xf32>
    %139 = tpu.matmul %0, %138, %cst_93 {dimension_numbers = #tpu.dot_dimension_numbers<[1], [0], [0], [1], [0, 0, 1, 1], [], []>} : vector<64x64xf32>, vector<64x128xf32>, vector<64x128xf32> -> vector<64x128xf32>
    %c0_94 = arith.constant 0 : index
    %c0_95 = arith.constant 0 : index
    %140 = vector.load %arg10[%c0_94, %c0_95] : memref<1x128xf32, #tpu.memory_space<vmem>>, vector<1x128xf32>
    %141 = vector.broadcast %140 : vector<1x128xf32> to vector<64x128xf32>
    %142 = arith.addf %139, %141 : vector<64x128xf32>
    %c3 = arith.constant 3 : index
    %c0_96 = arith.constant 0 : index
    %c0_97 = arith.constant 0 : index
    %143 = vector.load %arg3[%c3, %c0_96, %c0_97] : memref<6x128x128xf32, #tpu.memory_space<vmem>>, vector<1x128x128xf32>
    %144 = vector.shape_cast %143 : vector<1x128x128xf32> to vector<128x128xf32>
    %c3_98 = arith.constant 3 : index
    %c0_99 = arith.constant 0 : index
    %c0_100 = arith.constant 0 : index
    %145 = vector.load %arg4[%c3_98, %c0_99, %c0_100] : memref<6x1x128xf32, #tpu.memory_space<vmem>>, vector<1x1x128xf32>
    %146 = vector.shape_cast %145 : vector<1x1x128xf32> to vector<1x128xf32>
    %cst_101 = arith.constant dense<0.000000e+00> : vector<64x128xf32>
    %147 = tpu.matmul %142, %144, %cst_101 {dimension_numbers = #tpu.dot_dimension_numbers<[1], [0], [0], [1], [0, 0, 1, 1], [], []>} : vector<64x128xf32>, vector<128x128xf32>, vector<64x128xf32> -> vector<64x128xf32>
    %cst_102 = arith.constant dense<0.000000e+00> : vector<64x128xf32>
    %148 = tpu.matmul %0, %147, %cst_102 {dimension_numbers = #tpu.dot_dimension_numbers<[1], [0], [0], [1], [0, 0, 1, 1], [], []>} : vector<64x64xf32>, vector<64x128xf32>, vector<64x128xf32> -> vector<64x128xf32>
    %149 = vector.broadcast %146 : vector<1x128xf32> to vector<64x128xf32>
    %150 = arith.addf %148, %149 : vector<64x128xf32>
    %cst_103 = arith.constant dense<0.000000e+00> : vector<128xf32>
    %151 = vector.multi_reduction <add>, %150, %cst_103 [0] : vector<64x128xf32> to vector<128xf32>
    %152 = vector.shape_cast %151 : vector<128xf32> to vector<1x128xf32>
    %cst_104 = arith.constant 6.400000e+01 : f32
    %153 = vector.broadcast %cst_104 : f32 to vector<1x128xf32>
    %154 = arith.divf %152, %153 : vector<1x128xf32>
    %155 = vector.broadcast %154 : vector<1x128xf32> to vector<64x128xf32>
    %156 = arith.subf %150, %155 : vector<64x128xf32>
    %157 = arith.mulf %156, %156 : vector<64x128xf32>
    %cst_105 = arith.constant dense<0.000000e+00> : vector<128xf32>
    %158 = vector.multi_reduction <add>, %157, %cst_105 [0] : vector<64x128xf32> to vector<128xf32>
    %159 = vector.shape_cast %158 : vector<128xf32> to vector<1x128xf32>
    %cst_106 = arith.constant 6.400000e+01 : f32
    %160 = vector.broadcast %cst_106 : f32 to vector<1x128xf32>
    %161 = arith.divf %159, %160 : vector<1x128xf32>
    %cst_107 = arith.constant 9.99999974E-6 : f32
    %162 = vector.broadcast %cst_107 : f32 to vector<1x128xf32>
    %163 = arith.addf %161, %162 : vector<1x128xf32>
    %164 = math.rsqrt %163 : vector<1x128xf32>
    %165 = vector.broadcast %164 : vector<1x128xf32> to vector<64x128xf32>
    %166 = arith.mulf %156, %165 : vector<64x128xf32>
    %c3_108 = arith.constant 3 : index
    %c0_109 = arith.constant 0 : index
    %c0_110 = arith.constant 0 : index
    %167 = vector.load %arg5[%c3_108, %c0_109, %c0_110] : memref<6x1x128xf32, #tpu.memory_space<vmem>>, vector<1x1x128xf32>
    %168 = vector.shape_cast %167 : vector<1x1x128xf32> to vector<1x128xf32>
    %169 = vector.broadcast %168 : vector<1x128xf32> to vector<64x128xf32>
    %170 = arith.mulf %166, %169 : vector<64x128xf32>
    %c3_111 = arith.constant 3 : index
    %c0_112 = arith.constant 0 : index
    %c0_113 = arith.constant 0 : index
    %171 = vector.load %arg6[%c3_111, %c0_112, %c0_113] : memref<6x1x128xf32, #tpu.memory_space<vmem>>, vector<1x1x128xf32>
    %172 = vector.shape_cast %171 : vector<1x1x128xf32> to vector<1x128xf32>
    %173 = vector.broadcast %172 : vector<1x128xf32> to vector<64x128xf32>
    %174 = arith.addf %170, %173 : vector<64x128xf32>
    %c3_114 = arith.constant 3 : index
    %c0_115 = arith.constant 0 : index
    %c0_116 = arith.constant 0 : index
    %175 = vector.load %arg7[%c3_114, %c0_115, %c0_116] : memref<6x128x128xf32, #tpu.memory_space<vmem>>, vector<1x128x128xf32>
    %176 = vector.shape_cast %175 : vector<1x128x128xf32> to vector<128x128xf32>
    %cst_117 = arith.constant dense<0.000000e+00> : vector<64x128xf32>
    %177 = tpu.matmul %142, %176, %cst_117 {dimension_numbers = #tpu.dot_dimension_numbers<[1], [0], [0], [1], [0, 0, 1, 1], [], []>} : vector<64x128xf32>, vector<128x128xf32>, vector<64x128xf32> -> vector<64x128xf32>
    %c3_118 = arith.constant 3 : index
    %c0_119 = arith.constant 0 : index
    %c0_120 = arith.constant 0 : index
    %178 = vector.load %arg8[%c3_118, %c0_119, %c0_120] : memref<6x1x128xf32, #tpu.memory_space<vmem>>, vector<1x1x128xf32>
    %179 = vector.shape_cast %178 : vector<1x1x128xf32> to vector<1x128xf32>
    %180 = vector.broadcast %179 : vector<1x128xf32> to vector<64x128xf32>
    %181 = arith.addf %177, %180 : vector<64x128xf32>
    %cst_121 = arith.constant 0.000000e+00 : f32
    %182 = vector.broadcast %cst_121 : f32 to vector<64x128xf32>
    %183 = arith.maximumf %174, %182 : vector<64x128xf32>
    %184 = arith.addf %183, %181 : vector<64x128xf32>
    %c4 = arith.constant 4 : index
    %c0_122 = arith.constant 0 : index
    %c0_123 = arith.constant 0 : index
    %185 = vector.load %arg3[%c4, %c0_122, %c0_123] : memref<6x128x128xf32, #tpu.memory_space<vmem>>, vector<1x128x128xf32>
    %186 = vector.shape_cast %185 : vector<1x128x128xf32> to vector<128x128xf32>
    %c4_124 = arith.constant 4 : index
    %c0_125 = arith.constant 0 : index
    %c0_126 = arith.constant 0 : index
    %187 = vector.load %arg4[%c4_124, %c0_125, %c0_126] : memref<6x1x128xf32, #tpu.memory_space<vmem>>, vector<1x1x128xf32>
    %188 = vector.shape_cast %187 : vector<1x1x128xf32> to vector<1x128xf32>
    %cst_127 = arith.constant dense<0.000000e+00> : vector<64x128xf32>
    %189 = tpu.matmul %184, %186, %cst_127 {dimension_numbers = #tpu.dot_dimension_numbers<[1], [0], [0], [1], [0, 0, 1, 1], [], []>} : vector<64x128xf32>, vector<128x128xf32>, vector<64x128xf32> -> vector<64x128xf32>
    %cst_128 = arith.constant dense<0.000000e+00> : vector<64x128xf32>
    %190 = tpu.matmul %0, %189, %cst_128 {dimension_numbers = #tpu.dot_dimension_numbers<[1], [0], [0], [1], [0, 0, 1, 1], [], []>} : vector<64x64xf32>, vector<64x128xf32>, vector<64x128xf32> -> vector<64x128xf32>
    %191 = vector.broadcast %188 : vector<1x128xf32> to vector<64x128xf32>
    %192 = arith.addf %190, %191 : vector<64x128xf32>
    %cst_129 = arith.constant dense<0.000000e+00> : vector<128xf32>
    %193 = vector.multi_reduction <add>, %192, %cst_129 [0] : vector<64x128xf32> to vector<128xf32>
    %194 = vector.shape_cast %193 : vector<128xf32> to vector<1x128xf32>
    %cst_130 = arith.constant 6.400000e+01 : f32
    %195 = vector.broadcast %cst_130 : f32 to vector<1x128xf32>
    %196 = arith.divf %194, %195 : vector<1x128xf32>
    %197 = vector.broadcast %196 : vector<1x128xf32> to vector<64x128xf32>
    %198 = arith.subf %192, %197 : vector<64x128xf32>
    %199 = arith.mulf %198, %198 : vector<64x128xf32>
    %cst_131 = arith.constant dense<0.000000e+00> : vector<128xf32>
    %200 = vector.multi_reduction <add>, %199, %cst_131 [0] : vector<64x128xf32> to vector<128xf32>
    %201 = vector.shape_cast %200 : vector<128xf32> to vector<1x128xf32>
    %cst_132 = arith.constant 6.400000e+01 : f32
    %202 = vector.broadcast %cst_132 : f32 to vector<1x128xf32>
    %203 = arith.divf %201, %202 : vector<1x128xf32>
    %cst_133 = arith.constant 9.99999974E-6 : f32
    %204 = vector.broadcast %cst_133 : f32 to vector<1x128xf32>
    %205 = arith.addf %203, %204 : vector<1x128xf32>
    %206 = math.rsqrt %205 : vector<1x128xf32>
    %207 = vector.broadcast %206 : vector<1x128xf32> to vector<64x128xf32>
    %208 = arith.mulf %198, %207 : vector<64x128xf32>
    %c4_134 = arith.constant 4 : index
    %c0_135 = arith.constant 0 : index
    %c0_136 = arith.constant 0 : index
    %209 = vector.load %arg5[%c4_134, %c0_135, %c0_136] : memref<6x1x128xf32, #tpu.memory_space<vmem>>, vector<1x1x128xf32>
    %210 = vector.shape_cast %209 : vector<1x1x128xf32> to vector<1x128xf32>
    %211 = vector.broadcast %210 : vector<1x128xf32> to vector<64x128xf32>
    %212 = arith.mulf %208, %211 : vector<64x128xf32>
    %c4_137 = arith.constant 4 : index
    %c0_138 = arith.constant 0 : index
    %c0_139 = arith.constant 0 : index
    %213 = vector.load %arg6[%c4_137, %c0_138, %c0_139] : memref<6x1x128xf32, #tpu.memory_space<vmem>>, vector<1x1x128xf32>
    %214 = vector.shape_cast %213 : vector<1x1x128xf32> to vector<1x128xf32>
    %215 = vector.broadcast %214 : vector<1x128xf32> to vector<64x128xf32>
    %216 = arith.addf %212, %215 : vector<64x128xf32>
    %c4_140 = arith.constant 4 : index
    %c0_141 = arith.constant 0 : index
    %c0_142 = arith.constant 0 : index
    %217 = vector.load %arg7[%c4_140, %c0_141, %c0_142] : memref<6x128x128xf32, #tpu.memory_space<vmem>>, vector<1x128x128xf32>
    %218 = vector.shape_cast %217 : vector<1x128x128xf32> to vector<128x128xf32>
    %cst_143 = arith.constant dense<0.000000e+00> : vector<64x128xf32>
    %219 = tpu.matmul %184, %218, %cst_143 {dimension_numbers = #tpu.dot_dimension_numbers<[1], [0], [0], [1], [0, 0, 1, 1], [], []>} : vector<64x128xf32>, vector<128x128xf32>, vector<64x128xf32> -> vector<64x128xf32>
    %c4_144 = arith.constant 4 : index
    %c0_145 = arith.constant 0 : index
    %c0_146 = arith.constant 0 : index
    %220 = vector.load %arg8[%c4_144, %c0_145, %c0_146] : memref<6x1x128xf32, #tpu.memory_space<vmem>>, vector<1x1x128xf32>
    %221 = vector.shape_cast %220 : vector<1x1x128xf32> to vector<1x128xf32>
    %222 = vector.broadcast %221 : vector<1x128xf32> to vector<64x128xf32>
    %223 = arith.addf %219, %222 : vector<64x128xf32>
    %cst_147 = arith.constant 0.000000e+00 : f32
    %224 = vector.broadcast %cst_147 : f32 to vector<64x128xf32>
    %225 = arith.maximumf %216, %224 : vector<64x128xf32>
    %226 = arith.addf %225, %223 : vector<64x128xf32>
    %c5 = arith.constant 5 : index
    %c0_148 = arith.constant 0 : index
    %c0_149 = arith.constant 0 : index
    %227 = vector.load %arg3[%c5, %c0_148, %c0_149] : memref<6x128x128xf32, #tpu.memory_space<vmem>>, vector<1x128x128xf32>
    %228 = vector.shape_cast %227 : vector<1x128x128xf32> to vector<128x128xf32>
    %c5_150 = arith.constant 5 : index
    %c0_151 = arith.constant 0 : index
    %c0_152 = arith.constant 0 : index
    %229 = vector.load %arg4[%c5_150, %c0_151, %c0_152] : memref<6x1x128xf32, #tpu.memory_space<vmem>>, vector<1x1x128xf32>
    %230 = vector.shape_cast %229 : vector<1x1x128xf32> to vector<1x128xf32>
    %cst_153 = arith.constant dense<0.000000e+00> : vector<64x128xf32>
    %231 = tpu.matmul %226, %228, %cst_153 {dimension_numbers = #tpu.dot_dimension_numbers<[1], [0], [0], [1], [0, 0, 1, 1], [], []>} : vector<64x128xf32>, vector<128x128xf32>, vector<64x128xf32> -> vector<64x128xf32>
    %cst_154 = arith.constant dense<0.000000e+00> : vector<64x128xf32>
    %232 = tpu.matmul %0, %231, %cst_154 {dimension_numbers = #tpu.dot_dimension_numbers<[1], [0], [0], [1], [0, 0, 1, 1], [], []>} : vector<64x64xf32>, vector<64x128xf32>, vector<64x128xf32> -> vector<64x128xf32>
    %233 = vector.broadcast %230 : vector<1x128xf32> to vector<64x128xf32>
    %234 = arith.addf %232, %233 : vector<64x128xf32>
    %cst_155 = arith.constant dense<0.000000e+00> : vector<128xf32>
    %235 = vector.multi_reduction <add>, %234, %cst_155 [0] : vector<64x128xf32> to vector<128xf32>
    %236 = vector.shape_cast %235 : vector<128xf32> to vector<1x128xf32>
    %cst_156 = arith.constant 6.400000e+01 : f32
    %237 = vector.broadcast %cst_156 : f32 to vector<1x128xf32>
    %238 = arith.divf %236, %237 : vector<1x128xf32>
    %239 = vector.broadcast %238 : vector<1x128xf32> to vector<64x128xf32>
    %240 = arith.subf %234, %239 : vector<64x128xf32>
    %241 = arith.mulf %240, %240 : vector<64x128xf32>
    %cst_157 = arith.constant dense<0.000000e+00> : vector<128xf32>
    %242 = vector.multi_reduction <add>, %241, %cst_157 [0] : vector<64x128xf32> to vector<128xf32>
    %243 = vector.shape_cast %242 : vector<128xf32> to vector<1x128xf32>
    %cst_158 = arith.constant 6.400000e+01 : f32
    %244 = vector.broadcast %cst_158 : f32 to vector<1x128xf32>
    %245 = arith.divf %243, %244 : vector<1x128xf32>
    %cst_159 = arith.constant 9.99999974E-6 : f32
    %246 = vector.broadcast %cst_159 : f32 to vector<1x128xf32>
    %247 = arith.addf %245, %246 : vector<1x128xf32>
    %248 = math.rsqrt %247 : vector<1x128xf32>
    %249 = vector.broadcast %248 : vector<1x128xf32> to vector<64x128xf32>
    %250 = arith.mulf %240, %249 : vector<64x128xf32>
    %c5_160 = arith.constant 5 : index
    %c0_161 = arith.constant 0 : index
    %c0_162 = arith.constant 0 : index
    %251 = vector.load %arg5[%c5_160, %c0_161, %c0_162] : memref<6x1x128xf32, #tpu.memory_space<vmem>>, vector<1x1x128xf32>
    %252 = vector.shape_cast %251 : vector<1x1x128xf32> to vector<1x128xf32>
    %253 = vector.broadcast %252 : vector<1x128xf32> to vector<64x128xf32>
    %254 = arith.mulf %250, %253 : vector<64x128xf32>
    %c5_163 = arith.constant 5 : index
    %c0_164 = arith.constant 0 : index
    %c0_165 = arith.constant 0 : index
    %255 = vector.load %arg6[%c5_163, %c0_164, %c0_165] : memref<6x1x128xf32, #tpu.memory_space<vmem>>, vector<1x1x128xf32>
    %256 = vector.shape_cast %255 : vector<1x1x128xf32> to vector<1x128xf32>
    %257 = vector.broadcast %256 : vector<1x128xf32> to vector<64x128xf32>
    %258 = arith.addf %254, %257 : vector<64x128xf32>
    %c5_166 = arith.constant 5 : index
    %c0_167 = arith.constant 0 : index
    %c0_168 = arith.constant 0 : index
    %259 = vector.load %arg7[%c5_166, %c0_167, %c0_168] : memref<6x128x128xf32, #tpu.memory_space<vmem>>, vector<1x128x128xf32>
    %260 = vector.shape_cast %259 : vector<1x128x128xf32> to vector<128x128xf32>
    %cst_169 = arith.constant dense<0.000000e+00> : vector<64x128xf32>
    %261 = tpu.matmul %226, %260, %cst_169 {dimension_numbers = #tpu.dot_dimension_numbers<[1], [0], [0], [1], [0, 0, 1, 1], [], []>} : vector<64x128xf32>, vector<128x128xf32>, vector<64x128xf32> -> vector<64x128xf32>
    %c5_170 = arith.constant 5 : index
    %c0_171 = arith.constant 0 : index
    %c0_172 = arith.constant 0 : index
    %262 = vector.load %arg8[%c5_170, %c0_171, %c0_172] : memref<6x1x128xf32, #tpu.memory_space<vmem>>, vector<1x1x128xf32>
    %263 = vector.shape_cast %262 : vector<1x1x128xf32> to vector<1x128xf32>
    %264 = vector.broadcast %263 : vector<1x128xf32> to vector<64x128xf32>
    %265 = arith.addf %261, %264 : vector<64x128xf32>
    %cst_173 = arith.constant 0.000000e+00 : f32
    %266 = vector.broadcast %cst_173 : f32 to vector<64x128xf32>
    %267 = arith.maximumf %258, %266 : vector<64x128xf32>
    %268 = arith.addf %267, %265 : vector<64x128xf32>
    %c0_174 = arith.constant 0 : index
    %c0_175 = arith.constant 0 : index
    %269 = vector.load %arg11[%c0_174, %c0_175] : memref<64x128xf32, #tpu.memory_space<vmem>>, vector<64x128xf32>
    tpu.vector_store %arg11[%c0_174, %c0_175], %268 {strides = array<i32>} : memref<64x128xf32, #tpu.memory_space<vmem>>, vector<64x128xf32>,
    return
  }
  func.func @transform_0(%arg0: i32) -> (i32, i32) {
    %c0_i32 = arith.constant 0 : i32
    %c0_i32_0 = arith.constant 0 : i32
    %c0_i32_1 = arith.constant 0 : i32
    return %c0_i32, %c0_i32_0 : i32, i32
  }
  func.func @transform_1(%arg0: i32) -> (i32, i32) {
    %c0_i32 = arith.constant 0 : i32
    %c0_i32_0 = arith.constant 0 : i32
    %c0_i32_1 = arith.constant 0 : i32
    return %c0_i32, %c0_i32_0 : i32, i32
  }
  func.func @transform_2(%arg0: i32) -> (i32, i32, i32) {
    %c0_i32 = arith.constant 0 : i32
    %c0_i32_0 = arith.constant 0 : i32
    %c0_i32_1 = arith.constant 0 : i32
    %c0_i32_2 = arith.constant 0 : i32
    return %c0_i32, %c0_i32_0, %c0_i32_1 : i32, i32, i32
  }
  func.func @transform_3(%arg0: i32) -> (i32, i32, i32) {
    %c0_i32 = arith.constant 0 : i32
    %c0_i32_0 = arith.constant 0 : i32
    %c0_i32_1 = arith.constant 0 : i32
    %c0_i32_2 = arith.constant 0 : i32
    return %c0_i32, %c0_i32_0, %c0_i32_1 : i32, i32, i32
  }
  func.func @transform_4(%arg0: i32) -> (i32, i32, i32) {
    %c0_i32 = arith.constant 0 : i32
    %c0_i32_0 = arith.constant 0 : i32
    %c0_i32_1 = arith.constant 0 : i32
    %c0_i32_2 = arith.constant 0 : i32
    return %c0_i32, %c0_i32_0, %c0_i32_1 : i32, i32, i32
  }
  func.func @transform_5(%arg0: i32) -> (i32, i32, i32) {
    %c0_i32 = arith.constant 0 : i32
    %c0_i32_0 = arith.constant 0 : i32
    %c0_i32_1 = arith.constant 0 : i32
    %c0_i32_2 = arith.constant 0 : i32
    return %c0_i32, %c0_i32_0, %c0_i32_1 : i32, i32, i32
  }
  func.func @transform_6(%arg0: i32) -> (i32, i32, i32) {
    %c0_i32 = arith.constant 0 : i32
    %c0_i32_0 = arith.constant 0 : i32
    %c0_i32_1 = arith.constant 0 : i32
    %c0_i32_2 = arith.constant 0 : i32
    return %c0_i32, %c0_i32_0, %c0_i32_1 : i32, i32, i32
  }
  func.func @transform_7(%arg0: i32) -> (i32, i32, i32) {
    %c0_i32 = arith.constant 0 : i32
    %c0_i32_0 = arith.constant 0 : i32
    %c0_i32_1 = arith.constant 0 : i32
    %c0_i32_2 = arith.constant 0 : i32
    return %c0_i32, %c0_i32_0, %c0_i32_1 : i32, i32, i32
  }
  func.func @transform_8(%arg0: i32) -> (i32, i32, i32) {
    %c0_i32 = arith.constant 0 : i32
    %c0_i32_0 = arith.constant 0 : i32
    %c0_i32_1 = arith.constant 0 : i32
    %c0_i32_2 = arith.constant 0 : i32
    return %c0_i32, %c0_i32_0, %c0_i32_1 : i32, i32, i32
  }
  func.func @transform_9(%arg0: i32) -> (i32, i32) {
    %c0_i32 = arith.constant 0 : i32
    %c0_i32_0 = arith.constant 0 : i32
    %c0_i32_1 = arith.constant 0 : i32
    return %c0_i32, %c0_i32_0 : i32, i32
  }
  func.func @transform_10(%arg0: i32) -> (i32, i32) {
    %c0_i32 = arith.constant 0 : i32
    %c0_i32_0 = arith.constant 0 : i32
    %c0_i32_1 = arith.constant 0 : i32
    return %c0_i32, %c0_i32_0 : i32, i32
  }
}

</mosaic_0001>

<llo_original>
// kernel: _lambda_.1
$region0: #{_lambda_.1}
  #allocation0 [shape = 'u32[]', space=smem, size = 0x4, offset = 0x4, fixed_abs, tag = 'smem constant byte address 0x4 - core index']
  #allocation1 [shape = 'u32[72,128]{1,0:T(1,128)}', space=vmem, size = 0x9000, scoped, tag = 'internal scratch']
  %s0 = inlined_call_operand.hbm [shape: f32[64,128], index: 0, kind: input, shape index: {}]
  %s1 = inlined_call_operand.hbm [shape: f32[64,64], index: 1, kind: input, shape index: {}]
  %s2 = inlined_call_operand.hbm [shape: f32[6,128,128], index: 2, kind: input, shape index: {}]
  %s3 = inlined_call_operand.hbm [shape: f32[6,1,128], index: 3, kind: input, shape index: {}]
  %s4 = inlined_call_operand.vmem [shape: f32[6,1,128], index: 4, kind: input, shape index: {}]
  %s5 = inlined_call_operand.hbm [shape: f32[6,1,128], index: 5, kind: input, shape index: {}]
  %s6 = inlined_call_operand.hbm [shape: f32[6,128,128], index: 6, kind: input, shape index: {}]
  %s7 = inlined_call_operand.hbm [shape: f32[6,1,128], index: 7, kind: input, shape index: {}]
  %s8 = inlined_call_operand.hbm [shape: f32[3,128,128], index: 8, kind: input, shape index: {}]
  %s9 = inlined_call_operand.vmem [shape: f32[1,128], index: 9, kind: input, shape index: {}]
  %s10 = inlined_call_operand.hbm [shape: f32[64,128], index: 10, kind: output, shape index: {}]
  %s11 = sld [smem:[#allocation0]]
  $region82: #{_lambda_.1} parent=0
    _
  %s13 = ssub.s32 1, %s11
  %s14 = scalar_select 0, %s13, %s11
  $region1: #{_lambda_.1} parent=0
    #allocation2 [shape = 'u8[32768]{0}', space=vmem, size = 0x8000, scoped, tag = 'input window, operand 0, single buffered']
    #allocation3 [shape = 's32[1]{0}', space=sflag, size = 0x4, scoped, tag = 'scoped memory for _lambda_.1']
    #allocation4 [shape = 's32[1]{0}', space=sflag, size = 0x4, scoped, tag = 'scoped memory for _lambda_.1']
    #allocation5 [shape = 'u8[32768]{0}', space=vmem, size = 0x8000, scoped, tag = 'input window, operand 1, single buffered']
    #allocation6 [shape = 's32[1]{0}', space=sflag, size = 0x4, scoped, tag = 'scoped memory for _lambda_.1']
    #allocation7 [shape = 'u8[393216]{0}', space=vmem, size = 0x60000, scoped, tag = 'input window, operand 2, single buffered']
    #allocation8 [shape = 'u8[3072]{0}', space=vmem, size = 0xc00, scoped, tag = 'input window, operand 3, single buffered']
    #allocation9 [shape = 's32[1]{0}', space=sflag, size = 0x4, scoped, tag = 'scoped memory for _lambda_.1']
    #allocation10 [shape = 'u8[3072]{0}', space=vmem, size = 0xc00, scoped, tag = 'input window, operand 5, single buffered']
    #allocation11 [shape = 'u8[393216]{0}', space=vmem, size = 0x60000, scoped, tag = 'input window, operand 6, single buffered']
    #allocation12 [shape = 's32[1]{0}', space=sflag, size = 0x4, scoped, tag = 'scoped memory for _lambda_.1']
    #allocation13 [shape = 'u8[3072]{0}', space=vmem, size = 0xc00, scoped, tag = 'input window, operand 7, single buffered']
    #allocation14 [shape = 'u8[196608]{0}', space=vmem, size = 0x30000, scoped, tag = 'input window, operand 8, single buffered']
    #allocation15 [shape = 's32[1]{0}', space=sflag, size = 0x4, scoped, tag = 'scoped memory for _lambda_.1']
    #allocation16 [shape = 'u8[32768]{0}', space=vmem, size = 0x8000, scoped, tag = 'output window, operand 0, single buffered']
    %15 = vsyncpa [#allocation3], 0
    %16 = vsyncpa [#allocation6], 0
    %17 = vsyncpa [#allocation9], 0
    %18 = vsyncpa [#allocation12], 0
    %19 = vsyncpa [#allocation15], 0
    %20 = vsyncpa [#allocation4], 0
    // Predicated region
    $region2: #{_lambda_.1} parent=1 // pred_check
      _
    $region3: #{_lambda_.1} parent=1 // pred_check_branch
      %22 = sbr.rel (0) target = $region5
    $region4: #{_lambda_.1} parent=1 // pred_region
      %24 = vsyncadd [#allocation3], 0
      %s25 = sshll.u32 %s0, 4
      %s26 = int_to_ptr.hbm [resolvable:$true] %s25
      %s27 = sshll.u32 [#allocation2], 4
      %s28 = int_to_ptr.vmem [resolvable:$true] %s27
      %33 = dma.hbm_to_vmem [thread:$0]  %s26, 1024, %s28, [#allocation3], 128, 128, 8
    $region5: #{_lambda_.1} parent=1 // pred_fallthru
      _
    // Predicated region
    $region6: #{_lambda_.1} parent=1 // pred_check
      _
    $region7: #{_lambda_.1} parent=1 // pred_check_branch
      %35 = sbr.rel (0) target = $region9
    $region8: #{_lambda_.1} parent=1 // pred_region
      %37 = vsyncadd [#allocation6], 0
      %s38 = sshll.u32 %s1, 4
      %s39 = int_to_ptr.hbm [resolvable:$true] %s38
      %s40 = sshll.u32 [#allocation5], 4
      %s41 = int_to_ptr.vmem [resolvable:$true] %s40
      %46 = dma.hbm_to_vmem [thread:$0]  %s39, 1024, %s41, [#allocation6], 128, 128, 8
    $region9: #{_lambda_.1} parent=1 // pred_fallthru
      _
    // Predicated region
    $region10: #{_lambda_.1} parent=1 // pred_check
      _
    $region11: #{_lambda_.1} parent=1 // pred_check_branch
      %48 = sbr.rel (0) target = $region13
    $region12: #{_lambda_.1} parent=1 // pred_region
      %50 = vsyncadd [#allocation6], 0
      %s51 = sshll.u32 %s2, 4
      %s52 = int_to_ptr.hbm [resolvable:$true] %s51
      %s53 = sshll.u32 [#allocation7], 4
      %s54 = int_to_ptr.vmem [resolvable:$true] %s53
      %59 = dma.hbm_to_vmem [thread:$0]  %s52, 12288, %s54, [#allocation6], 128, 128, 8
    $region13: #{_lambda_.1} parent=1 // pred_fallthru
      _
    // Predicated region
    $region14: #{_lambda_.1} parent=1 // pred_check
      _
    $region15: #{_lambda_.1} parent=1 // pred_check_branch
      %61 = sbr.rel (0) target = $region17
    $region16: #{_lambda_.1} parent=1 // pred_region
      %63 = vsyncadd [#allocation9], 0
      %s64 = sshll.u32 %s3, 4
      %s65 = int_to_ptr.hbm [resolvable:$true] %s64
      %s66 = sshll.u32 [#allocation8], 4
      %s67 = int_to_ptr.vmem [resolvable:$true] %s66
      %72 = dma.hbm_to_vmem [thread:$0]  %s65, 96, %s67, [#allocation9], 16, 16, 1
    $region17: #{_lambda_.1} parent=1 // pred_fallthru
      _
    // Predicated region
    $region18: #{_lambda_.1} parent=1 // pred_check
      _
    $region19: #{_lambda_.1} parent=1 // pred_check_branch
      %74 = sbr.rel (0) target = $region21
    $region20: #{_lambda_.1} parent=1 // pred_region
      _
    $region21: #{_lambda_.1} parent=1 // pred_fallthru
      _
    // Predicated region
    $region22: #{_lambda_.1} parent=1 // pred_check
      _
    $region23: #{_lambda_.1} parent=1 // pred_check_branch
      %76 = sbr.rel (0) target = $region25
    $region24: #{_lambda_.1} parent=1 // pred_region
      %78 = vsyncadd [#allocation9], 0
      %s79 = sshll.u32 %s5, 4
      %s80 = int_to_ptr.hbm [resolvable:$true] %s79
      %s81 = sshll.u32 [#allocation10], 4
      %s82 = int_to_ptr.vmem [resolvable:$true] %s81
      %87 = dma.hbm_to_vmem [thread:$0]  %s80, 96, %s82, [#allocation9], 16, 16, 1
    $region25: #{_lambda_.1} parent=1 // pred_fallthru
      _
    // Predicated region
    $region26: #{_lambda_.1} parent=1 // pred_check
      _
    $region27: #{_lambda_.1} parent=1 // pred_check_branch
      %89 = sbr.rel (0) target = $region29
    $region28: #{_lambda_.1} parent=1 // pred_region
      %91 = vsyncadd [#allocation12], 0
      %s92 = sshll.u32 %s6, 4
      %s93 = int_to_ptr.hbm [resolvable:$true] %s92
      %s94 = sshll.u32 [#allocation11], 4
      %s95 = int_to_ptr.vmem [resolvable:$true] %s94
      %100 = dma.hbm_to_vmem [thread:$0]  %s93, 12288, %s95, [#allocation12], 128, 128, 8
    $region29: #{_lambda_.1} parent=1 // pred_fallthru
      _
    // Predicated region
    $region30: #{_lambda_.1} parent=1 // pred_check
      _
    $region31: #{_lambda_.1} parent=1 // pred_check_branch
      %102 = sbr.rel (0) target = $region33
    $region32: #{_lambda_.1} parent=1 // pred_region
      %104 = vsyncadd [#allocation12], 0
      %s105 = sshll.u32 %s7, 4
      %s106 = int_to_ptr.hbm [resolvable:$true] %s105
      %s107 = sshll.u32 [#allocation13], 4
      %s108 = int_to_ptr.vmem [resolvable:$true] %s107
      %113 = dma.hbm_to_vmem [thread:$0]  %s106, 96, %s108, [#allocation12], 16, 16, 1
    $region33: #{_lambda_.1} parent=1 // pred_fallthru
      _
    // Predicated region
    $region34: #{_lambda_.1} parent=1 // pred_check
      _
    $region35: #{_lambda_.1} parent=1 // pred_check_branch
      %115 = sbr.rel (0) target = $region37
    $region36: #{_lambda_.1} parent=1 // pred_region
      %117 = vsyncadd [#allocation15], 0
      %s118 = sshll.u32 %s8, 4
      %s119 = int_to_ptr.hbm [resolvable:$true] %s118
      %s120 = sshll.u32 [#allocation14], 4
      %s121 = int_to_ptr.vmem [resolvable:$true] %s120
      %126 = dma.hbm_to_vmem [thread:$0]  %s119, 6144, %s121, [#allocation15], 128, 128, 8
    $region37: #{_lambda_.1} parent=1 // pred_fallthru
      _
    // Predicated region
    $region38: #{_lambda_.1} parent=1 // pred_check
      _
    $region39: #{_lambda_.1} parent=1 // pred_check_branch
      %128 = sbr.rel (0) target = $region41
    $region40: #{_lambda_.1} parent=1 // pred_region
      _
    $region41: #{_lambda_.1} parent=1 // pred_fallthru
      _
    // Predicated region
    $region42: #{_lambda_.1} parent=1 // pred_check
      _
    $region43: #{_lambda_.1} parent=1 // pred_check_branch
      %130 = sbr.rel (0) target = $region45
    $region44: #{_lambda_.1} parent=1 // pred_region
      %132 = dma.done [#allocation3], 1024
    $region45: #{_lambda_.1} parent=1 // pred_fallthru
      _
    // Predicated region
    $region46: #{_lambda_.1} parent=1 // pred_check
      _
    $region47: #{_lambda_.1} parent=1 // pred_check_branch
      %134 = sbr.rel (0) target = $region49
    $region48: #{_lambda_.1} parent=1 // pred_region
      %136 = dma.done [#allocation6], 1024
    $region49: #{_lambda_.1} parent=1 // pred_fallthru
      _
    // Predicated region
    $region50: #{_lambda_.1} parent=1 // pred_check
      _
    $region51: #{_lambda_.1} parent=1 // pred_check_branch
      %138 = sbr.rel (0) target = $region53
    $region52: #{_lambda_.1} parent=1 // pred_region
      %140 = dma.done [#allocation6], 12288
    $region53: #{_lambda_.1} parent=1 // pred_fallthru
      _
    // Predicated region
    $region54: #{_lambda_.1} parent=1 // pred_check
      _
    $region55: #{_lambda_.1} parent=1 // pred_check_branch
      %142 = sbr.rel (0) target = $region57
    $region56: #{_lambda_.1} parent=1 // pred_region
      %144 = dma.done [#allocation9], 96
    $region57: #{_lambda_.1} parent=1 // pred_fallthru
      _
    // Predicated region
    $region58: #{_lambda_.1} parent=1 // pred_check
      _
    $region59: #{_lambda_.1} parent=1 // pred_check_branch
      %146 = sbr.rel (0) target = $region61
    $region60: #{_lambda_.1} parent=1 // pred_region
      %148 = dma.done [#allocation9], 96
    $region61: #{_lambda_.1} parent=1 // pred_fallthru
      _
    // Predicated region
    $region62: #{_lambda_.1} parent=1 // pred_check
      _
    $region63: #{_lambda_.1} parent=1 // pred_check_branch
      %150 = sbr.rel (0) target = $region65
    $region64: #{_lambda_.1} parent=1 // pred_region
      %152 = dma.done [#allocation12], 12288
    $region65: #{_lambda_.1} parent=1 // pred_fallthru
      _
    // Predicated region
    $region66: #{_lambda_.1} parent=1 // pred_check
      _
    $region67: #{_lambda_.1} parent=1 // pred_check_branch
      %154 = sbr.rel (0) target = $region69
    $region68: #{_lambda_.1} parent=1 // pred_region
      %156 = dma.done [#allocation12], 96
    $region69: #{_lambda_.1} parent=1 // pred_fallthru
      _
    // Predicated region
    $region70: #{_lambda_.1} parent=1 // pred_check
      _
    $region71: #{_lambda_.1} parent=1 // pred_check_branch
      %158 = sbr.rel (0) target = $region73
    $region72: #{_lambda_.1} parent=1 // pred_region
      %160 = dma.done [#allocation15], 6144
    $region73: #{_lambda_.1} parent=1 // pred_fallthru
      _
    %v161 = vld [vmem:[#allocation5] sm:$0xff]
    %v162 = vld [vmem:[#allocation5 + $0x8] sm:$0xff]
    %v163 = vld [vmem:[#allocation5 + $0x10] sm:$0xff]
    %v164 = vld [vmem:[#allocation5 + $0x18] sm:$0xff]
    %v165 = vld [vmem:[#allocation5 + $0x20] sm:$0xff]
    %v166 = vld [vmem:[#allocation5 + $0x28] sm:$0xff]
    %v167 = vld [vmem:[#allocation5 + $0x30] sm:$0xff]
    %v168 = vld [vmem:[#allocation5 + $0x38] sm:$0xff]
    %v169 = vld [vmem:[#allocation2] sm:$0xff]
    %v170 = vld [vmem:[#allocation2 + $0x8] sm:$0xff]
    %v171 = vld [vmem:[#allocation2 + $0x10] sm:$0xff]
    %v172 = vld [vmem:[#allocation2 + $0x18] sm:$0xff]
    %v173 = vld [vmem:[#allocation2 + $0x20] sm:$0xff]
    %v174 = vld [vmem:[#allocation2 + $0x28] sm:$0xff]
    %v175 = vld [vmem:[#allocation2 + $0x30] sm:$0xff]
    %v176 = vld [vmem:[#allocation2 + $0x38] sm:$0xff]
    %v177 = vld [vmem:[#allocation7] sm:$0xff]
    %v178 = vld [vmem:[#allocation7 + $0x8] sm:$0xff]
    %v179 = vld [vmem:[#allocation7 + $0x10] sm:$0xff]
    %v180 = vld [vmem:[#allocation7 + $0x18] sm:$0xff]
    %v181 = vld [vmem:[#allocation7 + $0x20] sm:$0xff]
    %v182 = vld [vmem:[#allocation7 + $0x28] sm:$0xff]
    %v183 = vld [vmem:[#allocation7 + $0x30] sm:$0xff]
    %v184 = vld [vmem:[#allocation7 + $0x38] sm:$0xff]
    %v185 = vld [vmem:[#allocation7 + $0x40] sm:$0xff]
    %v186 = vld [vmem:[#allocation7 + $0x48] sm:$0xff]
    %v187 = vld [vmem:[#allocation7 + $0x50] sm:$0xff]
    %v188 = vld [vmem:[#allocation7 + $0x58] sm:$0xff]
    %v189 = vld [vmem:[#allocation7 + $0x60] sm:$0xff]
    %v190 = vld [vmem:[#allocation7 + $0x68] sm:$0xff]
    %v191 = vld [vmem:[#allocation7 + $0x70] sm:$0xff]
    %v192 = vld [vmem:[#allocation7 + $0x78] sm:$0xff]
    %v193 = vld [vmem:[#allocation8] sm:$0x1]
    %194 = vmatpush.msra.mxu0 %v192
    %195 = vmatpush.msra.mxu0 %v191
    %196 = vmatpush.msra.mxu0 %v190
    %197 = vmatpush.msra.mxu0 %v189
    %198 = vmatpush.msra.mxu0 %v188
    %199 = vmatpush.msra.mxu0 %v187
    %200 = vmatpush.msra.mxu0 %v186
    %201 = vmatpush.msra.mxu0 %v185
    %202 = vmatpush.msra.mxu0 %v184
    %203 = vmatpush.msra.mxu0 %v183
    %204 = vmatpush.msra.mxu0 %v182
    %205 = vmatpush.msra.mxu0 %v181
    %206 = vmatpush.msra.mxu0 %v180
    %207 = vmatpush.msra.mxu0 %v179
    %208 = vmatpush.msra.mxu0 %v178
    %209 = vmatpush.msra.mxu0 %v177
    %210 = vmatmul.f32.gmra.mxu0 %v169
    %v211 = vpop.f32.mrf.mxu0
    %v212 = vadd.f32 0.0, %v211
    %213 = vmatmul.f32.gmra.mxu0 %v170
    %v214 = vpop.f32.mrf.mxu0
    %v215 = vadd.f32 0.0, %v214
    %216 = vmatmul.f32.gmra.mxu0 %v171
    %v217 = vpop.f32.mrf.mxu0
    %v218 = vadd.f32 0.0, %v217
    %219 = vmatmul.f32.gmra.mxu0 %v172
    %v220 = vpop.f32.mrf.mxu0
    %v221 = vadd.f32 0.0, %v220
    %222 = vmatmul.f32.gmra.mxu0 %v173
    %v223 = vpop.f32.mrf.mxu0
    %v224 = vadd.f32 0.0, %v223
    %225 = vmatmul.f32.gmra.mxu0 %v174
    %v226 = vpop.f32.mrf.mxu0
    %v227 = vadd.f32 0.0, %v226
    %228 = vmatmul.f32.gmra.mxu0 %v175
    %v229 = vpop.f32.mrf.mxu0
    %v230 = vadd.f32 0.0, %v229
    %231 = vmatmul.f32.gmra.mxu0 %v176
    %v232 = vpop.f32.mrf.mxu0
    %v233 = vadd.f32 0.0, %v232
    %234 = vdwg.mxu0
    %v236 = vperm.slane %v193, 0
    %vm238 = vcmask 523264
    %v240 = vsel %vm238, %v161, 0
    %v243 = vsel %vm238, %v162, 0
    %v246 = vsel %vm238, %v163, 0
    %v249 = vsel %vm238, %v164, 0
    %v252 = vsel %vm238, %v165, 0
    %v255 = vsel %vm238, %v166, 0
    %v258 = vsel %vm238, %v167, 0
    %v261 = vsel %vm238, %v168, 0
    %263 = vmatpush.msra.mxu0 0.0
    %264 = vmatpush.msra.mxu0 0.0
    %265 = vmatpush.msra.mxu0 0.0
    %266 = vmatpush.msra.mxu0 0.0
    %267 = vmatpush.msra.mxu0 0.0
    %268 = vmatpush.msra.mxu0 0.0
    %269 = vmatpush.msra.mxu0 0.0
    %270 = vmatpush.msra.mxu0 0.0
    %271 = vmatpush.msra.mxu0 %v233
    %272 = vmatpush.msra.mxu0 %v230
    %273 = vmatpush.msra.mxu0 %v227
    %274 = vmatpush.msra.mxu0 %v224
    %275 = vmatpush.msra.mxu0 %v221
    %276 = vmatpush.msra.mxu0 %v218
    %277 = vmatpush.msra.mxu0 %v215
    %278 = vmatpush.msra.mxu0 %v212
    %279 = vmatmul.f32.gmra.mxu0 %v240
    %v280 = vpop.f32.mrf.mxu0
    %v281 = vadd.f32 %v236, %v280
    %282 = vmatmul.f32.gmra.mxu0 %v243
    %v283 = vpop.f32.mrf.mxu0
    %v284 = vadd.f32 %v236, %v283
    %285 = vmatmul.f32.gmra.mxu0 %v246
    %v286 = vpop.f32.mrf.mxu0
    %v287 = vadd.f32 %v236, %v286
    %288 = vmatmul.f32.gmra.mxu0 %v249
    %v289 = vpop.f32.mrf.mxu0
    %v290 = vadd.f32 %v236, %v289
    %291 = vmatmul.f32.gmra.mxu0 %v252
    %v292 = vpop.f32.mrf.mxu0
    %v293 = vadd.f32 %v236, %v292
    %294 = vmatmul.f32.gmra.mxu0 %v255
    %v295 = vpop.f32.mrf.mxu0
    %v296 = vadd.f32 %v236, %v295
    %297 = vmatmul.f32.gmra.mxu0 %v258
    %v298 = vpop.f32.mrf.mxu0
    %v299 = vadd.f32 %v236, %v298
    %300 = vmatmul.f32.gmra.mxu0 %v261
    %v301 = vpop.f32.mrf.mxu0
    %v302 = vadd.f32 %v236, %v301
    %303 = vdwg.mxu0
    %v304 = vadd.f32 %v281, %v284
    %v305 = vadd.f32 %v304, %v287
    %v306 = vadd.f32 %v305, %v290
    %v307 = vadd.f32 %v306, %v293
    %v308 = vadd.f32 %v307, %v296
    %v309 = vadd.f32 %v308, %v299
    %v310 = vadd.f32 %v309, %v302
    %v311 = vrot.slane %v310, 4
    %v312 = vadd.f32 %v310, %v311
    %v313 = vrot.slane %v312, 2
    %v314 = vadd.f32 %v312, %v313
    %v315 = vrot.slane %v314, 1
    %v316 = vadd.f32 %v314, %v315
    %v317 = vrcp.pop 64.0
    %v318 = vmul.f32 64.0, %v317
    %v319 = vsub.f32 1.0, %v318
    %v320 = vmul.f32 %v317, %v319
    %v321 = vadd.f32 %v317, %v320
    %vm322 = vweird.f32 %v317
    %v323 = vsel %vm322, %v317, %v321
    %v324 = vmul.f32 %v316, %v323
    %v325 = vsub.f32 %v281, %v324
    %v326 = vsub.f32 %v284, %v324
    %v327 = vsub.f32 %v287, %v324
    %v328 = vsub.f32 %v290, %v324
    %v329 = vsub.f32 %v293, %v324
    %v330 = vsub.f32 %v296, %v324
    %v331 = vsub.f32 %v299, %v324
    %v332 = vsub.f32 %v302, %v324
    %v333 = vmul.f32 %v325, %v325
    %v334 = vmul.f32 %v326, %v326
    %v335 = vmul.f32 %v327, %v327
    %v336 = vmul.f32 %v328, %v328
    %v337 = vmul.f32 %v329, %v329
    %v338 = vmul.f32 %v330, %v330
    %v339 = vmul.f32 %v331, %v331
    %v340 = vmul.f32 %v332, %v332
    %v341 = vadd.f32 %v333, %v334
    %v342 = vadd.f32 %v341, %v335
    %v343 = vadd.f32 %v342, %v336
    %v344 = vadd.f32 %v343, %v337
    %v345 = vadd.f32 %v344, %v338
    %v346 = vadd.f32 %v345, %v339
    %v347 = vadd.f32 %v346, %v340
    %v348 = vrot.slane %v347, 4
    %v349 = vadd.f32 %v347, %v348
    %v350 = vrot.slane %v349, 2
    %v351 = vadd.f32 %v349, %v350
    %v352 = vrot.slane %v351, 1
    %v353 = vadd.f32 %v351, %v352
    %v354 = vmul.f32 %v353, %v323
    %v355 = vadd.f32 %v354, 1e-05
    %v356 = vrsqrt.pop %v355
    %v357 = vmul.f32 %v356, %v355
    %v358 = vmul.f32 %v357, %v356
    %v359 = vmul.f32 0.5, %v358
    %v360 = vsub.f32 1.5, %v359
    %v361 = vmul.f32 %v356, %v360
    %vm362 = vweird.f32 %v355
    %vm363 = vweird.f32 %v356
    %vm364 = vmor %vm362, %vm363
    %v365 = vsel %vm364, %v356, %v361
    %v366 = vmul.f32 %v325, %v365
    %v367 = vmul.f32 %v326, %v365
    %v368 = vmul.f32 %v327, %v365
    %v369 = vmul.f32 %v328, %v365
    %v370 = vmul.f32 %v329, %v365
    %v371 = vmul.f32 %v330, %v365
    %v372 = vmul.f32 %v331, %v365
    %v373 = vmul.f32 %v332, %v365
    %v374 = vld [vmem:[%s4] sm:$0x1]
    %v376 = vperm.slane %v374, 0
    %v378 = vmul.f32 %v366, %v376
    %v379 = vmul.f32 %v367, %v376
    %v380 = vmul.f32 %v368, %v376
    %v381 = vmul.f32 %v369, %v376
    %v382 = vmul.f32 %v370, %v376
    %v383 = vmul.f32 %v371, %v376
    %v384 = vmul.f32 %v372, %v376
    %v385 = vmul.f32 %v373, %v376
    %v386 = vld [vmem:[#allocation10] sm:$0x1]
    %v388 = vperm.slane %v386, 0
    %v390 = vadd.f32 %v378, %v388
    %v391 = vadd.f32 %v379, %v388
    %v392 = vadd.f32 %v380, %v388
    %v393 = vadd.f32 %v381, %v388
    %v394 = vadd.f32 %v382, %v388
    %v395 = vadd.f32 %v383, %v388
    %v396 = vadd.f32 %v384, %v388
    %v397 = vadd.f32 %v385, %v388
    %v398 = vld [vmem:[#allocation11] sm:$0xff]
    %v399 = vld [vmem:[#allocation11 + $0x8] sm:$0xff]
    %v400 = vld [vmem:[#allocation11 + $0x10] sm:$0xff]
    %v401 = vld [vmem:[#allocation11 + $0x18] sm:$0xff]
    %v402 = vld [vmem:[#allocation11 + $0x20] sm:$0xff]
    %v403 = vld [vmem:[#allocation11 + $0x28] sm:$0xff]
    %v404 = vld [vmem:[#allocation11 + $0x30] sm:$0xff]
    %v405 = vld [vmem:[#allocation11 + $0x38] sm:$0xff]
    %v406 = vld [vmem:[#allocation11 + $0x40] sm:$0xff]
    %v407 = vld [vmem:[#allocation11 + $0x48] sm:$0xff]
    %v408 = vld [vmem:[#allocation11 + $0x50] sm:$0xff]
    %v409 = vld [vmem:[#allocation11 + $0x58] sm:$0xff]
    %v410 = vld [vmem:[#allocation11 + $0x60] sm:$0xff]
    %v411 = vld [vmem:[#allocation11 + $0x68] sm:$0xff]
    %v412 = vld [vmem:[#allocation11 + $0x70] sm:$0xff]
    %v413 = vld [vmem:[#allocation11 + $0x78] sm:$0xff]
    %v414 = vld [vmem:[#allocation13] sm:$0x1]
    %v416 = vperm.slane %v414, 0
    %418 = vmatpush.msra.mxu0 %v413
    %419 = vmatpush.msra.mxu0 %v412
    %420 = vmatpush.msra.mxu0 %v411
    %421 = vmatpush.msra.mxu0 %v410
    %422 = vmatpush.msra.mxu0 %v409
    %423 = vmatpush.msra.mxu0 %v408
    %424 = vmatpush.msra.mxu0 %v407
    %425 = vmatpush.msra.mxu0 %v406
    %426 = vmatpush.msra.mxu0 %v405
    %427 = vmatpush.msra.mxu0 %v404
    %428 = vmatpush.msra.mxu0 %v403
    %429 = vmatpush.msra.mxu0 %v402
    %430 = vmatpush.msra.mxu0 %v401
    %431 = vmatpush.msra.mxu0 %v400
    %432 = vmatpush.msra.mxu0 %v399
    %433 = vmatpush.msra.mxu0 %v398
    %434 = vmatmul.f32.gmra.mxu0 %v169
    %v435 = vpop.f32.mrf.mxu0
    %v436 = vadd.f32 %v416, %v435
    %437 = vmatmul.f32.gmra.mxu0 %v170
    %v438 = vpop.f32.mrf.mxu0
    %v439 = vadd.f32 %v416, %v438
    %440 = vmatmul.f32.gmra.mxu0 %v171
    %v441 = vpop.f32.mrf.mxu0
    %v442 = vadd.f32 %v416, %v441
    %443 = vmatmul.f32.gmra.mxu0 %v172
    %v444 = vpop.f32.mrf.mxu0
    %v445 = vadd.f32 %v416, %v444
    %446 = vmatmul.f32.gmra.mxu0 %v173
    %v447 = vpop.f32.mrf.mxu0
    %v448 = vadd.f32 %v416, %v447
    %449 = vmatmul.f32.gmra.mxu0 %v174
    %v450 = vpop.f32.mrf.mxu0
    %v451 = vadd.f32 %v416, %v450
    %452 = vmatmul.f32.gmra.mxu0 %v175
    %v453 = vpop.f32.mrf.mxu0
    %v454 = vadd.f32 %v416, %v453
    %455 = vmatmul.f32.gmra.mxu0 %v176
    %v456 = vpop.f32.mrf.mxu0
    %v457 = vadd.f32 %v416, %v456
    %458 = vdwg.mxu0
    %v459 = vmax.f32 %v390, 0.0
    %v460 = vmax.f32 %v391, 0.0
    %v461 = vmax.f32 %v392, 0.0
    %v462 = vmax.f32 %v393, 0.0
    %v463 = vmax.f32 %v394, 0.0
    %v464 = vmax.f32 %v395, 0.0
    %v465 = vmax.f32 %v396, 0.0
    %v466 = vmax.f32 %v397, 0.0
    %v467 = vadd.f32 %v459, %v436
    %v468 = vadd.f32 %v460, %v439
    %v469 = vadd.f32 %v461, %v442
    %v470 = vadd.f32 %v462, %v445
    %v471 = vadd.f32 %v463, %v448
    %v472 = vadd.f32 %v464, %v451
    %v473 = vadd.f32 %v465, %v454
    %v474 = vadd.f32 %v466, %v457
    %s475 = scalar_lea.vmem [#allocation7], 128
    %v476 = vld [vmem:[%s475] sm:$0xff]
    %v477 = vld [vmem:[%s475 + $0x8] sm:$0xff]
    %v478 = vld [vmem:[%s475 + $0x10] sm:$0xff]
    %v479 = vld [vmem:[%s475 + $0x18] sm:$0xff]
    %v480 = vld [vmem:[%s475 + $0x20] sm:$0xff]
    %v481 = vld [vmem:[%s475 + $0x28] sm:$0xff]
    %v482 = vld [vmem:[%s475 + $0x30] sm:$0xff]
    %v483 = vld [vmem:[%s475 + $0x38] sm:$0xff]
    %v484 = vld [vmem:[%s475 + $0x40] sm:$0xff]
    %v485 = vld [vmem:[%s475 + $0x48] sm:$0xff]
    %v486 = vld [vmem:[%s475 + $0x50] sm:$0xff]
    %v487 = vld [vmem:[%s475 + $0x58] sm:$0xff]
    %v488 = vld [vmem:[%s475 + $0x60] sm:$0xff]
    %v489 = vld [vmem:[%s475 + $0x68] sm:$0xff]
    %v490 = vld [vmem:[%s475 + $0x70] sm:$0xff]
    %v491 = vld [vmem:[%s475 + $0x78] sm:$0xff]
    %s492 = scalar_lea.vmem [#allocation8], 1
    %v493 = vld [vmem:[%s492] sm:$0x1]
    %494 = vmatpush.msra.mxu0 %v491
    %495 = vmatpush.msra.mxu0 %v490
    %496 = vmatpush.msra.mxu0 %v489
    %497 = vmatpush.msra.mxu0 %v488
    %498 = vmatpush.msra.mxu0 %v487
    %499 = vmatpush.msra.mxu0 %v486
    %500 = vmatpush.msra.mxu0 %v485
    %501 = vmatpush.msra.mxu0 %v484
    %502 = vmatpush.msra.mxu0 %v483
    %503 = vmatpush.msra.mxu0 %v482
    %504 = vmatpush.msra.mxu0 %v481
    %505 = vmatpush.msra.mxu0 %v480
    %506 = vmatpush.msra.mxu0 %v479
    %507 = vmatpush.msra.mxu0 %v478
    %508 = vmatpush.msra.mxu0 %v477
    %509 = vmatpush.msra.mxu0 %v476
    %510 = vmatmul.f32.gmra.mxu0 %v467
    %v511 = vpop.f32.mrf.mxu0
    %v512 = vadd.f32 0.0, %v511
    %513 = vmatmul.f32.gmra.mxu0 %v468
    %v514 = vpop.f32.mrf.mxu0
    %v515 = vadd.f32 0.0, %v514
    %516 = vmatmul.f32.gmra.mxu0 %v469
    %v517 = vpop.f32.mrf.mxu0
    %v518 = vadd.f32 0.0, %v517
    %519 = vmatmul.f32.gmra.mxu0 %v470
    %v520 = vpop.f32.mrf.mxu0
    %v521 = vadd.f32 0.0, %v520
    %522 = vmatmul.f32.gmra.mxu0 %v471
    %v523 = vpop.f32.mrf.mxu0
    %v524 = vadd.f32 0.0, %v523
    %525 = vmatmul.f32.gmra.mxu0 %v472
    %v526 = vpop.f32.mrf.mxu0
    %v527 = vadd.f32 0.0, %v526
    %528 = vmatmul.f32.gmra.mxu0 %v473
    %v529 = vpop.f32.mrf.mxu0
    %v530 = vadd.f32 0.0, %v529
    %531 = vmatmul.f32.gmra.mxu0 %v474
    %v532 = vpop.f32.mrf.mxu0
    %v533 = vadd.f32 0.0, %v532
    %534 = vdwg.mxu0
    %v536 = vperm.slane %v493, 0
    %538 = vmatpush.msra.mxu0 0.0
    %539 = vmatpush.msra.mxu0 0.0
    %540 = vmatpush.msra.mxu0 0.0
    %541 = vmatpush.msra.mxu0 0.0
    %542 = vmatpush.msra.mxu0 0.0
    %543 = vmatpush.msra.mxu0 0.0
    %544 = vmatpush.msra.mxu0 0.0
    %545 = vmatpush.msra.mxu0 0.0
    %546 = vmatpush.msra.mxu0 %v533
    %547 = vmatpush.msra.mxu0 %v530
    %548 = vmatpush.msra.mxu0 %v527
    %549 = vmatpush.msra.mxu0 %v524
    %550 = vmatpush.msra.mxu0 %v521
    %551 = vmatpush.msra.mxu0 %v518
    %552 = vmatpush.msra.mxu0 %v515
    %553 = vmatpush.msra.mxu0 %v512
    %554 = vmatmul.f32.gmra.mxu0 %v240
    %v555 = vpop.f32.mrf.mxu0
    %v556 = vadd.f32 %v536, %v555
    %557 = vmatmul.f32.gmra.mxu0 %v243
    %v558 = vpop.f32.mrf.mxu0
    %v559 = vadd.f32 %v536, %v558
    %560 = vmatmul.f32.gmra.mxu0 %v246
    %v561 = vpop.f32.mrf.mxu0
    %v562 = vadd.f32 %v536, %v561
    %563 = vmatmul.f32.gmra.mxu0 %v249
    %v564 = vpop.f32.mrf.mxu0
    %v565 = vadd.f32 %v536, %v564
    %566 = vmatmul.f32.gmra.mxu0 %v252
    %v567 = vpop.f32.mrf.mxu0
    %v568 = vadd.f32 %v536, %v567
    %569 = vmatmul.f32.gmra.mxu0 %v255
    %v570 = vpop.f32.mrf.mxu0
    %v571 = vadd.f32 %v536, %v570
    %572 = vmatmul.f32.gmra.mxu0 %v258
    %v573 = vpop.f32.mrf.mxu0
    %v574 = vadd.f32 %v536, %v573
    %575 = vmatmul.f32.gmra.mxu0 %v261
    %v576 = vpop.f32.mrf.mxu0
    %v577 = vadd.f32 %v536, %v576
    %578 = vdwg.mxu0
    %v579 = vadd.f32 %v556, %v559
    %v580 = vadd.f32 %v579, %v562
    %v581 = vadd.f32 %v580, %v565
    %v582 = vadd.f32 %v581, %v568
    %v583 = vadd.f32 %v582, %v571
    %v584 = vadd.f32 %v583, %v574
    %v585 = vadd.f32 %v584, %v577
    %v586 = vrot.slane %v585, 4
    %v587 = vadd.f32 %v585, %v586
    %v588 = vrot.slane %v587, 2
    %v589 = vadd.f32 %v587, %v588
    %v590 = vrot.slane %v589, 1
    %v591 = vadd.f32 %v589, %v590
    %v592 = vmul.f32 %v591, %v323
    %v593 = vsub.f32 %v556, %v592
    %v594 = vsub.f32 %v559, %v592
    %v595 = vsub.f32 %v562, %v592
    %v596 = vsub.f32 %v565, %v592
    %v597 = vsub.f32 %v568, %v592
    %v598 = vsub.f32 %v571, %v592
    %v599 = vsub.f32 %v574, %v592
    %v600 = vsub.f32 %v577, %v592
    %v601 = vmul.f32 %v593, %v593
    %v602 = vmul.f32 %v594, %v594
    %v603 = vmul.f32 %v595, %v595
    %v604 = vmul.f32 %v596, %v596
    %v605 = vmul.f32 %v597, %v597
    %v606 = vmul.f32 %v598, %v598
    %v607 = vmul.f32 %v599, %v599
    %v608 = vmul.f32 %v600, %v600
    %v609 = vadd.f32 %v601, %v602
    %v610 = vadd.f32 %v609, %v603
    %v611 = vadd.f32 %v610, %v604
    %v612 = vadd.f32 %v611, %v605
    %v613 = vadd.f32 %v612, %v606
    %v614 = vadd.f32 %v613, %v607
    %v615 = vadd.f32 %v614, %v608
    %v616 = vrot.slane %v615, 4
    %v617 = vadd.f32 %v615, %v616
    %v618 = vrot.slane %v617, 2
    %v619 = vadd.f32 %v617, %v618
    %v620 = vrot.slane %v619, 1
    %v621 = vadd.f32 %v619, %v620
    %v622 = vmul.f32 %v621, %v323
    %v623 = vadd.f32 %v622, 1e-05
    %v624 = vrsqrt.pop %v623
    %v625 = vmul.f32 %v624, %v623
    %v626 = vmul.f32 %v625, %v624
    %v627 = vmul.f32 0.5, %v626
    %v628 = vsub.f32 1.5, %v627
    %v629 = vmul.f32 %v624, %v628
    %vm630 = vweird.f32 %v623
    %vm631 = vweird.f32 %v624
    %vm632 = vmor %vm630, %vm631
    %v633 = vsel %vm632, %v624, %v629
    %v634 = vmul.f32 %v593, %v633
    %v635 = vmul.f32 %v594, %v633
    %v636 = vmul.f32 %v595, %v633
    %v637 = vmul.f32 %v596, %v633
    %v638 = vmul.f32 %v597, %v633
    %v639 = vmul.f32 %v598, %v633
    %v640 = vmul.f32 %v599, %v633
    %v641 = vmul.f32 %v600, %v633
    %s642 = scalar_lea.vmem %s4, 1
    %v643 = vld [vmem:[%s642] sm:$0x1]
    %v645 = vperm.slane %v643, 0
    %v647 = vmul.f32 %v634, %v645
    %v648 = vmul.f32 %v635, %v645
    %v649 = vmul.f32 %v636, %v645
    %v650 = vmul.f32 %v637, %v645
    %v651 = vmul.f32 %v638, %v645
    %v652 = vmul.f32 %v639, %v645
    %v653 = vmul.f32 %v640, %v645
    %v654 = vmul.f32 %v641, %v645
    %s655 = scalar_lea.vmem [#allocation10], 1
    %v656 = vld [vmem:[%s655] sm:$0x1]
    %v658 = vperm.slane %v656, 0
    %v660 = vadd.f32 %v647, %v658
    %v661 = vadd.f32 %v648, %v658
    %v662 = vadd.f32 %v649, %v658
    %v663 = vadd.f32 %v650, %v658
    %v664 = vadd.f32 %v651, %v658
    %v665 = vadd.f32 %v652, %v658
    %v666 = vadd.f32 %v653, %v658
    %v667 = vadd.f32 %v654, %v658
    %s668 = scalar_lea.vmem [#allocation11], 128
    %v669 = vld [vmem:[%s668] sm:$0xff]
    %v670 = vld [vmem:[%s668 + $0x8] sm:$0xff]
    %v671 = vld [vmem:[%s668 + $0x10] sm:$0xff]
    %v672 = vld [vmem:[%s668 + $0x18] sm:$0xff]
    %v673 = vld [vmem:[%s668 + $0x20] sm:$0xff]
    %v674 = vld [vmem:[%s668 + $0x28] sm:$0xff]
    %v675 = vld [vmem:[%s668 + $0x30] sm:$0xff]
    %v676 = vld [vmem:[%s668 + $0x38] sm:$0xff]
    %v677 = vld [vmem:[%s668 + $0x40] sm:$0xff]
    %v678 = vld [vmem:[%s668 + $0x48] sm:$0xff]
    %v679 = vld [vmem:[%s668 + $0x50] sm:$0xff]
    %v680 = vld [vmem:[%s668 + $0x58] sm:$0xff]
    %v681 = vld [vmem:[%s668 + $0x60] sm:$0xff]
    %v682 = vld [vmem:[%s668 + $0x68] sm:$0xff]
    %v683 = vld [vmem:[%s668 + $0x70] sm:$0xff]
    %v684 = vld [vmem:[%s668 + $0x78] sm:$0xff]
    %s685 = scalar_lea.vmem [#allocation13], 1
    %v686 = vld [vmem:[%s685] sm:$0x1]
    %v688 = vperm.slane %v686, 0
    %690 = vmatpush.msra.mxu0 %v684
    %691 = vmatpush.msra.mxu0 %v683
    %692 = vmatpush.msra.mxu0 %v682
    %693 = vmatpush.msra.mxu0 %v681
    %694 = vmatpush.msra.mxu0 %v680
    %695 = vmatpush.msra.mxu0 %v679
    %696 = vmatpush.msra.mxu0 %v678
    %697 = vmatpush.msra.mxu0 %v677
    %698 = vmatpush.msra.mxu0 %v676
    %699 = vmatpush.msra.mxu0 %v675
    %700 = vmatpush.msra.mxu0 %v674
    %701 = vmatpush.msra.mxu0 %v673
    %702 = vmatpush.msra.mxu0 %v672
    %703 = vmatpush.msra.mxu0 %v671
    %704 = vmatpush.msra.mxu0 %v670
    %705 = vmatpush.msra.mxu0 %v669
    %706 = vmatmul.f32.gmra.mxu0 %v467
    %v707 = vpop.f32.mrf.mxu0
    %v708 = vadd.f32 %v688, %v707
    %709 = vmatmul.f32.gmra.mxu0 %v468
    %v710 = vpop.f32.mrf.mxu0
    %v711 = vadd.f32 %v688, %v710
    %712 = vmatmul.f32.gmra.mxu0 %v469
    %v713 = vpop.f32.mrf.mxu0
    %v714 = vadd.f32 %v688, %v713
    %715 = vmatmul.f32.gmra.mxu0 %v470
    %v716 = vpop.f32.mrf.mxu0
    %v717 = vadd.f32 %v688, %v716
    %718 = vmatmul.f32.gmra.mxu0 %v471
    %v719 = vpop.f32.mrf.mxu0
    %v720 = vadd.f32 %v688, %v719
    %721 = vmatmul.f32.gmra.mxu0 %v472
    %v722 = vpop.f32.mrf.mxu0
    %v723 = vadd.f32 %v688, %v722
    %724 = vmatmul.f32.gmra.mxu0 %v473
    %v725 = vpop.f32.mrf.mxu0
    %v726 = vadd.f32 %v688, %v725
    %727 = vmatmul.f32.gmra.mxu0 %v474
    %v728 = vpop.f32.mrf.mxu0
    %v729 = vadd.f32 %v688, %v728
    %730 = vdwg.mxu0
    %v731 = vmax.f32 %v660, 0.0
    %v732 = vmax.f32 %v661, 0.0
    %v733 = vmax.f32 %v662, 0.0
    %v734 = vmax.f32 %v663, 0.0
    %v735 = vmax.f32 %v664, 0.0
    %v736 = vmax.f32 %v665, 0.0
    %v737 = vmax.f32 %v666, 0.0
    %v738 = vmax.f32 %v667, 0.0
    %v739 = vadd.f32 %v731, %v708
    %v740 = vadd.f32 %v732, %v711
    %v741 = vadd.f32 %v733, %v714
    %v742 = vadd.f32 %v734, %v717
    %v743 = vadd.f32 %v735, %v720
    %v744 = vadd.f32 %v736, %v723
    %v745 = vadd.f32 %v737, %v726
    %v746 = vadd.f32 %v738, %v729
    %s747 = scalar_lea.vmem [#allocation7], 256
    %v748 = vld [vmem:[%s747] sm:$0xff]
    %v749 = vld [vmem:[%s747 + $0x8] sm:$0xff]
    %v750 = vld [vmem:[%s747 + $0x10] sm:$0xff]
    %v751 = vld [vmem:[%s747 + $0x18] sm:$0xff]
    %v752 = vld [vmem:[%s747 + $0x20] sm:$0xff]
    %v753 = vld [vmem:[%s747 + $0x28] sm:$0xff]
    %v754 = vld [vmem:[%s747 + $0x30] sm:$0xff]
    %v755 = vld [vmem:[%s747 + $0x38] sm:$0xff]
    %v756 = vld [vmem:[%s747 + $0x40] sm:$0xff]
    %v757 = vld [vmem:[%s747 + $0x48] sm:$0xff]
    %v758 = vld [vmem:[%s747 + $0x50] sm:$0xff]
    %v759 = vld [vmem:[%s747 + $0x58] sm:$0xff]
    %v760 = vld [vmem:[%s747 + $0x60] sm:$0xff]
    %v761 = vld [vmem:[%s747 + $0x68] sm:$0xff]
    %v762 = vld [vmem:[%s747 + $0x70] sm:$0xff]
    %v763 = vld [vmem:[%s747 + $0x78] sm:$0xff]
    %s764 = scalar_lea.vmem [#allocation8], 2
    %v765 = vld [vmem:[%s764] sm:$0x1]
    %766 = vmatpush.msra.mxu0 %v763
    %767 = vmatpush.msra.mxu0 %v762
    %768 = vmatpush.msra.mxu0 %v761
    %769 = vmatpush.msra.mxu0 %v760
    %770 = vmatpush.msra.mxu0 %v759
    %771 = vmatpush.msra.mxu0 %v758
    %772 = vmatpush.msra.mxu0 %v757
    %773 = vmatpush.msra.mxu0 %v756
    %774 = vmatpush.msra.mxu0 %v755
    %775 = vmatpush.msra.mxu0 %v754
    %776 = vmatpush.msra.mxu0 %v753
    %777 = vmatpush.msra.mxu0 %v752
    %778 = vmatpush.msra.mxu0 %v751
    %779 = vmatpush.msra.mxu0 %v750
    %780 = vmatpush.msra.mxu0 %v749
    %781 = vmatpush.msra.mxu0 %v748
    %782 = vmatmul.f32.gmra.mxu0 %v739
    %v783 = vpop.f32.mrf.mxu0
    %v784 = vadd.f32 0.0, %v783
    %785 = vmatmul.f32.gmra.mxu0 %v740
    %v786 = vpop.f32.mrf.mxu0
    %v787 = vadd.f32 0.0, %v786
    %788 = vmatmul.f32.gmra.mxu0 %v741
    %v789 = vpop.f32.mrf.mxu0
    %v790 = vadd.f32 0.0, %v789
    %791 = vmatmul.f32.gmra.mxu0 %v742
    %v792 = vpop.f32.mrf.mxu0
    %v793 = vadd.f32 0.0, %v792
    %794 = vmatmul.f32.gmra.mxu0 %v743
    %v795 = vpop.f32.mrf.mxu0
    %v796 = vadd.f32 0.0, %v795
    %797 = vmatmul.f32.gmra.mxu0 %v744
    %v798 = vpop.f32.mrf.mxu0
    %v799 = vadd.f32 0.0, %v798
    %800 = vmatmul.f32.gmra.mxu0 %v745
    %v801 = vpop.f32.mrf.mxu0
    %v802 = vadd.f32 0.0, %v801
    %803 = vmatmul.f32.gmra.mxu0 %v746
    %v804 = vpop.f32.mrf.mxu0
    %v805 = vadd.f32 0.0, %v804
    %806 = vdwg.mxu0
    %v808 = vperm.slane %v765, 0
    %810 = vmatpush.msra.mxu0 0.0
    %811 = vmatpush.msra.mxu0 0.0
    %812 = vmatpush.msra.mxu0 0.0
    %813 = vmatpush.msra.mxu0 0.0
    %814 = vmatpush.msra.mxu0 0.0
    %815 = vmatpush.msra.mxu0 0.0
    %816 = vmatpush.msra.mxu0 0.0
    %817 = vmatpush.msra.mxu0 0.0
    %818 = vmatpush.msra.mxu0 %v805
    %819 = vmatpush.msra.mxu0 %v802
    %820 = vmatpush.msra.mxu0 %v799
    %821 = vmatpush.msra.mxu0 %v796
    %822 = vmatpush.msra.mxu0 %v793
    %823 = vmatpush.msra.mxu0 %v790
    %824 = vmatpush.msra.mxu0 %v787
    %825 = vmatpush.msra.mxu0 %v784
    %826 = vmatmul.f32.gmra.mxu0 %v240
    %v827 = vpop.f32.mrf.mxu0
    %v828 = vadd.f32 %v808, %v827
    %829 = vmatmul.f32.gmra.mxu0 %v243
    %v830 = vpop.f32.mrf.mxu0
    %v831 = vadd.f32 %v808, %v830
    %832 = vmatmul.f32.gmra.mxu0 %v246
    %v833 = vpop.f32.mrf.mxu0
    %v834 = vadd.f32 %v808, %v833
    %835 = vmatmul.f32.gmra.mxu0 %v249
    %v836 = vpop.f32.mrf.mxu0
    %v837 = vadd.f32 %v808, %v836
    %838 = vmatmul.f32.gmra.mxu0 %v252
    %v839 = vpop.f32.mrf.mxu0
    %v840 = vadd.f32 %v808, %v839
    %841 = vmatmul.f32.gmra.mxu0 %v255
    %v842 = vpop.f32.mrf.mxu0
    %v843 = vadd.f32 %v808, %v842
    %844 = vmatmul.f32.gmra.mxu0 %v258
    %v845 = vpop.f32.mrf.mxu0
    %v846 = vadd.f32 %v808, %v845
    %847 = vmatmul.f32.gmra.mxu0 %v261
    %v848 = vpop.f32.mrf.mxu0
    %v849 = vadd.f32 %v808, %v848
    %850 = vdwg.mxu0
    %v851 = vadd.f32 %v828, %v831
    %v852 = vadd.f32 %v851, %v834
    %v853 = vadd.f32 %v852, %v837
    %v854 = vadd.f32 %v853, %v840
    %v855 = vadd.f32 %v854, %v843
    %v856 = vadd.f32 %v855, %v846
    %v857 = vadd.f32 %v856, %v849
    %v858 = vrot.slane %v857, 4
    %v859 = vadd.f32 %v857, %v858
    %v860 = vrot.slane %v859, 2
    %v861 = vadd.f32 %v859, %v860
    %v862 = vrot.slane %v861, 1
    %v863 = vadd.f32 %v861, %v862
    %v864 = vmul.f32 %v863, %v323
    %v865 = vsub.f32 %v828, %v864
    %v866 = vsub.f32 %v831, %v864
    %v867 = vsub.f32 %v834, %v864
    %v868 = vsub.f32 %v837, %v864
    %v869 = vsub.f32 %v840, %v864
    %v870 = vsub.f32 %v843, %v864
    %v871 = vsub.f32 %v846, %v864
    %v872 = vsub.f32 %v849, %v864
    %v873 = vmul.f32 %v865, %v865
    %v874 = vmul.f32 %v866, %v866
    %v875 = vmul.f32 %v867, %v867
    %v876 = vmul.f32 %v868, %v868
    %v877 = vmul.f32 %v869, %v869
    %v878 = vmul.f32 %v870, %v870
    %v879 = vmul.f32 %v871, %v871
    %v880 = vmul.f32 %v872, %v872
    %v881 = vadd.f32 %v873, %v874
    %v882 = vadd.f32 %v881, %v875
    %v883 = vadd.f32 %v882, %v876
    %v884 = vadd.f32 %v883, %v877
    %v885 = vadd.f32 %v884, %v878
    %v886 = vadd.f32 %v885, %v879
    %v887 = vadd.f32 %v886, %v880
    %v888 = vrot.slane %v887, 4
    %v889 = vadd.f32 %v887, %v888
    %v890 = vrot.slane %v889, 2
    %v891 = vadd.f32 %v889, %v890
    %v892 = vrot.slane %v891, 1
    %v893 = vadd.f32 %v891, %v892
    %v894 = vmul.f32 %v893, %v323
    %v895 = vadd.f32 %v894, 1e-05
    %v896 = vrsqrt.pop %v895
    %v897 = vmul.f32 %v896, %v895
    %v898 = vmul.f32 %v897, %v896
    %v899 = vmul.f32 0.5, %v898
    %v900 = vsub.f32 1.5, %v899
    %v901 = vmul.f32 %v896, %v900
    %vm902 = vweird.f32 %v895
    %vm903 = vweird.f32 %v896
    %vm904 = vmor %vm902, %vm903
    %v905 = vsel %vm904, %v896, %v901
    %v906 = vmul.f32 %v865, %v905
    %v907 = vmul.f32 %v866, %v905
    %v908 = vmul.f32 %v867, %v905
    %v909 = vmul.f32 %v868, %v905
    %v910 = vmul.f32 %v869, %v905
    %v911 = vmul.f32 %v870, %v905
    %v912 = vmul.f32 %v871, %v905
    %v913 = vmul.f32 %v872, %v905
    %s914 = scalar_lea.vmem %s4, 2
    %v915 = vld [vmem:[%s914] sm:$0x1]
    %v917 = vperm.slane %v915, 0
    %v919 = vmul.f32 %v906, %v917
    %v920 = vmul.f32 %v907, %v917
    %v921 = vmul.f32 %v908, %v917
    %v922 = vmul.f32 %v909, %v917
    %v923 = vmul.f32 %v910, %v917
    %v924 = vmul.f32 %v911, %v917
    %v925 = vmul.f32 %v912, %v917
    %v926 = vmul.f32 %v913, %v917
    %s927 = scalar_lea.vmem [#allocation10], 2
    %v928 = vld [vmem:[%s927] sm:$0x1]
    %v930 = vperm.slane %v928, 0
    %v932 = vadd.f32 %v919, %v930
    %v933 = vadd.f32 %v920, %v930
    %v934 = vadd.f32 %v921, %v930
    %v935 = vadd.f32 %v922, %v930
    %v936 = vadd.f32 %v923, %v930
    %v937 = vadd.f32 %v924, %v930
    %v938 = vadd.f32 %v925, %v930
    %v939 = vadd.f32 %v926, %v930
    %s940 = scalar_lea.vmem [#allocation11], 256
    %v941 = vld [vmem:[%s940] sm:$0xff]
    %v942 = vld [vmem:[%s940 + $0x8] sm:$0xff]
    %v943 = vld [vmem:[%s940 + $0x10] sm:$0xff]
    %v944 = vld [vmem:[%s940 + $0x18] sm:$0xff]
    %v945 = vld [vmem:[%s940 + $0x20] sm:$0xff]
    %v946 = vld [vmem:[%s940 + $0x28] sm:$0xff]
    %v947 = vld [vmem:[%s940 + $0x30] sm:$0xff]
    %v948 = vld [vmem:[%s940 + $0x38] sm:$0xff]
    %v949 = vld [vmem:[%s940 + $0x40] sm:$0xff]
    %v950 = vld [vmem:[%s940 + $0x48] sm:$0xff]
    %v951 = vld [vmem:[%s940 + $0x50] sm:$0xff]
    %v952 = vld [vmem:[%s940 + $0x58] sm:$0xff]
    %v953 = vld [vmem:[%s940 + $0x60] sm:$0xff]
    %v954 = vld [vmem:[%s940 + $0x68] sm:$0xff]
    %v955 = vld [vmem:[%s940 + $0x70] sm:$0xff]
    %v956 = vld [vmem:[%s940 + $0x78] sm:$0xff]
    %s957 = scalar_lea.vmem [#allocation13], 2
    %v958 = vld [vmem:[%s957] sm:$0x1]
    %v960 = vperm.slane %v958, 0
    %962 = vmatpush.msra.mxu0 %v956
    %963 = vmatpush.msra.mxu0 %v955
    %964 = vmatpush.msra.mxu0 %v954
    %965 = vmatpush.msra.mxu0 %v953
    %966 = vmatpush.msra.mxu0 %v952
    %967 = vmatpush.msra.mxu0 %v951
    %968 = vmatpush.msra.mxu0 %v950
    %969 = vmatpush.msra.mxu0 %v949
    %970 = vmatpush.msra.mxu0 %v948
    %971 = vmatpush.msra.mxu0 %v947
    %972 = vmatpush.msra.mxu0 %v946
    %973 = vmatpush.msra.mxu0 %v945
    %974 = vmatpush.msra.mxu0 %v944
    %975 = vmatpush.msra.mxu0 %v943
    %976 = vmatpush.msra.mxu0 %v942
    %977 = vmatpush.msra.mxu0 %v941
    %978 = vmatmul.f32.gmra.mxu0 %v739
    %v979 = vpop.f32.mrf.mxu0
    %v980 = vadd.f32 %v960, %v979
    %981 = vmatmul.f32.gmra.mxu0 %v740
    %v982 = vpop.f32.mrf.mxu0
    %v983 = vadd.f32 %v960, %v982
    %984 = vmatmul.f32.gmra.mxu0 %v741
    %v985 = vpop.f32.mrf.mxu0
    %v986 = vadd.f32 %v960, %v985
    %987 = vmatmul.f32.gmra.mxu0 %v742
    %v988 = vpop.f32.mrf.mxu0
    %v989 = vadd.f32 %v960, %v988
    %990 = vmatmul.f32.gmra.mxu0 %v743
    %v991 = vpop.f32.mrf.mxu0
    %v992 = vadd.f32 %v960, %v991
    %993 = vmatmul.f32.gmra.mxu0 %v744
    %v994 = vpop.f32.mrf.mxu0
    %v995 = vadd.f32 %v960, %v994
    %996 = vmatmul.f32.gmra.mxu0 %v745
    %v997 = vpop.f32.mrf.mxu0
    %v998 = vadd.f32 %v960, %v997
    %999 = vmatmul.f32.gmra.mxu0 %v746
    %v1000 = vpop.f32.mrf.mxu0
    %v1001 = vadd.f32 %v960, %v1000
    %1002 = vdwg.mxu0
    %v1003 = vmax.f32 %v932, 0.0
    %v1004 = vmax.f32 %v933, 0.0
    %v1005 = vmax.f32 %v934, 0.0
    %v1006 = vmax.f32 %v935, 0.0
    %v1007 = vmax.f32 %v936, 0.0
    %v1008 = vmax.f32 %v937, 0.0
    %v1009 = vmax.f32 %v938, 0.0
    %v1010 = vmax.f32 %v939, 0.0
    %v1011 = vadd.f32 %v1003, %v980
    %v1012 = vadd.f32 %v1004, %v983
    %v1013 = vadd.f32 %v1005, %v986
    %v1014 = vadd.f32 %v1006, %v989
    %v1015 = vadd.f32 %v1007, %v992
    %v1016 = vadd.f32 %v1008, %v995
    %v1017 = vadd.f32 %v1009, %v998
    %v1018 = vadd.f32 %v1010, %v1001
    %v1019 = vld [vmem:[#allocation14] sm:$0xff]
    %v1020 = vld [vmem:[#allocation14 + $0x8] sm:$0xff]
    %v1021 = vld [vmem:[#allocation14 + $0x10] sm:$0xff]
    %v1022 = vld [vmem:[#allocation14 + $0x18] sm:$0xff]
    %v1023 = vld [vmem:[#allocation14 + $0x20] sm:$0xff]
    %v1024 = vld [vmem:[#allocation14 + $0x28] sm:$0xff]
    %v1025 = vld [vmem:[#allocation14 + $0x30] sm:$0xff]
    %v1026 = vld [vmem:[#allocation14 + $0x38] sm:$0xff]
    %v1027 = vld [vmem:[#allocation14 + $0x40] sm:$0xff]
    %v1028 = vld [vmem:[#allocation14 + $0x48] sm:$0xff]
    %v1029 = vld [vmem:[#allocation14 + $0x50] sm:$0xff]
    %v1030 = vld [vmem:[#allocation14 + $0x58] sm:$0xff]
    %v1031 = vld [vmem:[#allocation14 + $0x60] sm:$0xff]
    %v1032 = vld [vmem:[#allocation14 + $0x68] sm:$0xff]
    %v1033 = vld [vmem:[#allocation14 + $0x70] sm:$0xff]
    %v1034 = vld [vmem:[#allocation14 + $0x78] sm:$0xff]
    %s1035 = scalar_lea.vmem [#allocation14], 128
    %v1036 = vld [vmem:[%s1035] sm:$0xff]
    %v1037 = vld [vmem:[%s1035 + $0x8] sm:$0xff]
    %v1038 = vld [vmem:[%s1035 + $0x10] sm:$0xff]
    %v1039 = vld [vmem:[%s1035 + $0x18] sm:$0xff]
    %v1040 = vld [vmem:[%s1035 + $0x20] sm:$0xff]
    %v1041 = vld [vmem:[%s1035 + $0x28] sm:$0xff]
    %v1042 = vld [vmem:[%s1035 + $0x30] sm:$0xff]
    %v1043 = vld [vmem:[%s1035 + $0x38] sm:$0xff]
    %v1044 = vld [vmem:[%s1035 + $0x40] sm:$0xff]
    %v1045 = vld [vmem:[%s1035 + $0x48] sm:$0xff]
    %v1046 = vld [vmem:[%s1035 + $0x50] sm:$0xff]
    %v1047 = vld [vmem:[%s1035 + $0x58] sm:$0xff]
    %v1048 = vld [vmem:[%s1035 + $0x60] sm:$0xff]
    %v1049 = vld [vmem:[%s1035 + $0x68] sm:$0xff]
    %v1050 = vld [vmem:[%s1035 + $0x70] sm:$0xff]
    %v1051 = vld [vmem:[%s1035 + $0x78] sm:$0xff]
    %1052 = vmatpush.msra.mxu0 %v1051
    %1053 = vmatpush.msra.mxu0 %v1050
    %1054 = vmatpush.msra.mxu0 %v1049
    %1055 = vmatpush.msra.mxu0 %v1048
    %1056 = vmatpush.msra.mxu0 %v1047
    %1057 = vmatpush.msra.mxu0 %v1046
    %1058 = vmatpush.msra.mxu0 %v1045
    %1059 = vmatpush.msra.mxu0 %v1044
    %1060 = vmatpush.msra.mxu0 %v1043
    %1061 = vmatpush.msra.mxu0 %v1042
    %1062 = vmatpush.msra.mxu0 %v1041
    %1063 = vmatpush.msra.mxu0 %v1040
    %1064 = vmatpush.msra.mxu0 %v1039
    %1065 = vmatpush.msra.mxu0 %v1038
    %1066 = vmatpush.msra.mxu0 %v1037
    %1067 = vmatpush.msra.mxu0 %v1036
    %1068 = vmatmul.f32.gmra.mxu0 %v739
    %v1069 = vpop.f32.mrf.mxu0
    %v1070 = vadd.f32 0.0, %v1069
    %1071 = vmatmul.f32.gmra.mxu0 %v740
    %v1072 = vpop.f32.mrf.mxu0
    %v1073 = vadd.f32 0.0, %v1072
    %1074 = vmatmul.f32.gmra.mxu0 %v741
    %v1075 = vpop.f32.mrf.mxu0
    %v1076 = vadd.f32 0.0, %v1075
    %1077 = vmatmul.f32.gmra.mxu0 %v742
    %v1078 = vpop.f32.mrf.mxu0
    %v1079 = vadd.f32 0.0, %v1078
    %1080 = vmatmul.f32.gmra.mxu0 %v743
    %v1081 = vpop.f32.mrf.mxu0
    %v1082 = vadd.f32 0.0, %v1081
    %1083 = vmatmul.f32.gmra.mxu0 %v744
    %v1084 = vpop.f32.mrf.mxu0
    %v1085 = vadd.f32 0.0, %v1084
    %1086 = vmatmul.f32.gmra.mxu0 %v745
    %v1087 = vpop.f32.mrf.mxu0
    %v1088 = vadd.f32 0.0, %v1087
    %1089 = vmatmul.f32.gmra.mxu0 %v746
    %v1090 = vpop.f32.mrf.mxu0
    %v1091 = vadd.f32 0.0, %v1090
    %1092 = vdwg.mxu0
    %1093 = vmatpush.msra.mxu0 %v1034
    %1094 = vmatpush.msra.mxu0 %v1033
    %1095 = vmatpush.msra.mxu0 %v1032
    %1096 = vmatpush.msra.mxu0 %v1031
    %1097 = vmatpush.msra.mxu0 %v1030
    %1098 = vmatpush.msra.mxu0 %v1029
    %1099 = vmatpush.msra.mxu0 %v1028
    %1100 = vmatpush.msra.mxu0 %v1027
    %1101 = vmatpush.msra.mxu0 %v1026
    %1102 = vmatpush.msra.mxu0 %v1025
    %1103 = vmatpush.msra.mxu0 %v1024
    %1104 = vmatpush.msra.mxu0 %v1023
    %1105 = vmatpush.msra.mxu0 %v1022
    %1106 = vmatpush.msra.mxu0 %v1021
    %1107 = vmatpush.msra.mxu0 %v1020
    %1108 = vmatpush.msra.mxu0 %v1019
    %1109 = vmatmul.f32.gmra.mxu0 %v467
    %v1110 = vpop.f32.mrf.mxu0
    %v1111 = vadd.f32 %v1070, %v1110
    %1112 = vmatmul.f32.gmra.mxu0 %v468
    %v1113 = vpop.f32.mrf.mxu0
    %v1114 = vadd.f32 %v1073, %v1113
    %1115 = vmatmul.f32.gmra.mxu0 %v469
    %v1116 = vpop.f32.mrf.mxu0
    %v1117 = vadd.f32 %v1076, %v1116
    %1118 = vmatmul.f32.gmra.mxu0 %v470
    %v1119 = vpop.f32.mrf.mxu0
    %v1120 = vadd.f32 %v1079, %v1119
    %1121 = vmatmul.f32.gmra.mxu0 %v471
    %v1122 = vpop.f32.mrf.mxu0
    %v1123 = vadd.f32 %v1082, %v1122
    %1124 = vmatmul.f32.gmra.mxu0 %v472
    %v1125 = vpop.f32.mrf.mxu0
    %v1126 = vadd.f32 %v1085, %v1125
    %1127 = vmatmul.f32.gmra.mxu0 %v473
    %v1128 = vpop.f32.mrf.mxu0
    %v1129 = vadd.f32 %v1088, %v1128
    %1130 = vmatmul.f32.gmra.mxu0 %v474
    %v1131 = vpop.f32.mrf.mxu0
    %v1132 = vadd.f32 %v1091, %v1131
    %1133 = vdwg.mxu0
    %s1134 = scalar_lea.vmem [#allocation14], 256
    %v1135 = vld [vmem:[%s1134] sm:$0xff]
    %v1136 = vld [vmem:[%s1134 + $0x8] sm:$0xff]
    %v1137 = vld [vmem:[%s1134 + $0x10] sm:$0xff]
    %v1138 = vld [vmem:[%s1134 + $0x18] sm:$0xff]
    %v1139 = vld [vmem:[%s1134 + $0x20] sm:$0xff]
    %v1140 = vld [vmem:[%s1134 + $0x28] sm:$0xff]
    %v1141 = vld [vmem:[%s1134 + $0x30] sm:$0xff]
    %v1142 = vld [vmem:[%s1134 + $0x38] sm:$0xff]
    %v1143 = vld [vmem:[%s1134 + $0x40] sm:$0xff]
    %v1144 = vld [vmem:[%s1134 + $0x48] sm:$0xff]
    %v1145 = vld [vmem:[%s1134 + $0x50] sm:$0xff]
    %v1146 = vld [vmem:[%s1134 + $0x58] sm:$0xff]
    %v1147 = vld [vmem:[%s1134 + $0x60] sm:$0xff]
    %v1148 = vld [vmem:[%s1134 + $0x68] sm:$0xff]
    %v1149 = vld [vmem:[%s1134 + $0x70] sm:$0xff]
    %v1150 = vld [vmem:[%s1134 + $0x78] sm:$0xff]
    %1151 = vmatpush.msra.mxu0 %v1150
    %1152 = vmatpush.msra.mxu0 %v1149
    %1153 = vmatpush.msra.mxu0 %v1148
    %1154 = vmatpush.msra.mxu0 %v1147
    %1155 = vmatpush.msra.mxu0 %v1146
    %1156 = vmatpush.msra.mxu0 %v1145
    %1157 = vmatpush.msra.mxu0 %v1144
    %1158 = vmatpush.msra.mxu0 %v1143
    %1159 = vmatpush.msra.mxu0 %v1142
    %1160 = vmatpush.msra.mxu0 %v1141
    %1161 = vmatpush.msra.mxu0 %v1140
    %1162 = vmatpush.msra.mxu0 %v1139
    %1163 = vmatpush.msra.mxu0 %v1138
    %1164 = vmatpush.msra.mxu0 %v1137
    %1165 = vmatpush.msra.mxu0 %v1136
    %1166 = vmatpush.msra.mxu0 %v1135
    %1167 = vmatmul.f32.gmra.mxu0 %v1011
    %v1168 = vpop.f32.mrf.mxu0
    %v1169 = vadd.f32 0.0, %v1168
    %1170 = vmatmul.f32.gmra.mxu0 %v1012
    %v1171 = vpop.f32.mrf.mxu0
    %v1172 = vadd.f32 0.0, %v1171
    %1173 = vmatmul.f32.gmra.mxu0 %v1013
    %v1174 = vpop.f32.mrf.mxu0
    %v1175 = vadd.f32 0.0, %v1174
    %1176 = vmatmul.f32.gmra.mxu0 %v1014
    %v1177 = vpop.f32.mrf.mxu0
    %v1178 = vadd.f32 0.0, %v1177
    %1179 = vmatmul.f32.gmra.mxu0 %v1015
    %v1180 = vpop.f32.mrf.mxu0
    %v1181 = vadd.f32 0.0, %v1180
    %1182 = vmatmul.f32.gmra.mxu0 %v1016
    %v1183 = vpop.f32.mrf.mxu0
    %v1184 = vadd.f32 0.0, %v1183
    %1185 = vmatmul.f32.gmra.mxu0 %v1017
    %v1186 = vpop.f32.mrf.mxu0
    %v1187 = vadd.f32 0.0, %v1186
    %1188 = vmatmul.f32.gmra.mxu0 %v1018
    %v1189 = vpop.f32.mrf.mxu0
    %v1190 = vadd.f32 0.0, %v1189
    %1191 = vdwg.mxu0
    %v1192 = vadd.f32 %v1111, %v1169
    %v1193 = vadd.f32 %v1114, %v1172
    %v1194 = vadd.f32 %v1117, %v1175
    %v1195 = vadd.f32 %v1120, %v1178
    %v1196 = vadd.f32 %v1123, %v1181
    %v1197 = vadd.f32 %v1126, %v1184
    %v1198 = vadd.f32 %v1129, %v1187
    %v1199 = vadd.f32 %v1132, %v1190
    %v1200 = vld [vmem:[%s9] sm:$0x1]
    %v1202 = vperm.slane %v1200, 0
    %1204 = vmatpush.msra.mxu0 0.0
    %1205 = vmatpush.msra.mxu0 0.0
    %1206 = vmatpush.msra.mxu0 0.0
    %1207 = vmatpush.msra.mxu0 0.0
    %1208 = vmatpush.msra.mxu0 0.0
    %1209 = vmatpush.msra.mxu0 0.0
    %1210 = vmatpush.msra.mxu0 0.0
    %1211 = vmatpush.msra.mxu0 0.0
    %1212 = vmatpush.msra.mxu0 %v1199
    %1213 = vmatpush.msra.mxu0 %v1198
    %1214 = vmatpush.msra.mxu0 %v1197
    %1215 = vmatpush.msra.mxu0 %v1196
    %1216 = vmatpush.msra.mxu0 %v1195
    %1217 = vmatpush.msra.mxu0 %v1194
    %1218 = vmatpush.msra.mxu0 %v1193
    %1219 = vmatpush.msra.mxu0 %v1192
    %1220 = vmatmul.f32.gmra.mxu0 %v240
    %v1221 = vpop.f32.mrf.mxu0
    %v1222 = vadd.f32 %v1202, %v1221
    %1223 = vmatmul.f32.gmra.mxu0 %v243
    %v1224 = vpop.f32.mrf.mxu0
    %v1225 = vadd.f32 %v1202, %v1224
    %1226 = vmatmul.f32.gmra.mxu0 %v246
    %v1227 = vpop.f32.mrf.mxu0
    %v1228 = vadd.f32 %v1202, %v1227
    %1229 = vmatmul.f32.gmra.mxu0 %v249
    %v1230 = vpop.f32.mrf.mxu0
    %v1231 = vadd.f32 %v1202, %v1230
    %1232 = vmatmul.f32.gmra.mxu0 %v252
    %v1233 = vpop.f32.mrf.mxu0
    %v1234 = vadd.f32 %v1202, %v1233
    %1235 = vmatmul.f32.gmra.mxu0 %v255
    %v1236 = vpop.f32.mrf.mxu0
    %v1237 = vadd.f32 %v1202, %v1236
    %1238 = vmatmul.f32.gmra.mxu0 %v258
    %v1239 = vpop.f32.mrf.mxu0
    %v1240 = vadd.f32 %v1202, %v1239
    %1241 = vmatmul.f32.gmra.mxu0 %v261
    %v1242 = vpop.f32.mrf.mxu0
    %v1243 = vadd.f32 %v1202, %v1242
    %1244 = vdwg.mxu0
    %s1245 = scalar_lea.vmem [#allocation7], 384
    %v1246 = vld [vmem:[%s1245] sm:$0xff]
    %v1247 = vld [vmem:[%s1245 + $0x8] sm:$0xff]
    %v1248 = vld [vmem:[%s1245 + $0x10] sm:$0xff]
    %v1249 = vld [vmem:[%s1245 + $0x18] sm:$0xff]
    %v1250 = vld [vmem:[%s1245 + $0x20] sm:$0xff]
    %v1251 = vld [vmem:[%s1245 + $0x28] sm:$0xff]
    %v1252 = vld [vmem:[%s1245 + $0x30] sm:$0xff]
    %v1253 = vld [vmem:[%s1245 + $0x38] sm:$0xff]
    %v1254 = vld [vmem:[%s1245 + $0x40] sm:$0xff]
    %v1255 = vld [vmem:[%s1245 + $0x48] sm:$0xff]
    %v1256 = vld [vmem:[%s1245 + $0x50] sm:$0xff]
    %v1257 = vld [vmem:[%s1245 + $0x58] sm:$0xff]
    %v1258 = vld [vmem:[%s1245 + $0x60] sm:$0xff]
    %v1259 = vld [vmem:[%s1245 + $0x68] sm:$0xff]
    %v1260 = vld [vmem:[%s1245 + $0x70] sm:$0xff]
    %v1261 = vld [vmem:[%s1245 + $0x78] sm:$0xff]
    %s1262 = scalar_lea.vmem [#allocation8], 3
    %v1263 = vld [vmem:[%s1262] sm:$0x1]
    %1264 = vmatpush.msra.mxu0 %v1261
    %1265 = vmatpush.msra.mxu0 %v1260
    %1266 = vmatpush.msra.mxu0 %v1259
    %1267 = vmatpush.msra.mxu0 %v1258
    %1268 = vmatpush.msra.mxu0 %v1257
    %1269 = vmatpush.msra.mxu0 %v1256
    %1270 = vmatpush.msra.mxu0 %v1255
    %1271 = vmatpush.msra.mxu0 %v1254
    %1272 = vmatpush.msra.mxu0 %v1253
    %1273 = vmatpush.msra.mxu0 %v1252
    %1274 = vmatpush.msra.mxu0 %v1251
    %1275 = vmatpush.msra.mxu0 %v1250
    %1276 = vmatpush.msra.mxu0 %v1249
    %1277 = vmatpush.msra.mxu0 %v1248
    %1278 = vmatpush.msra.mxu0 %v1247
    %1279 = vmatpush.msra.mxu0 %v1246
    %1280 = vmatmul.f32.gmra.mxu0 %v1222
    %v1281 = vpop.f32.mrf.mxu0
    %v1282 = vadd.f32 0.0, %v1281
    %1283 = vmatmul.f32.gmra.mxu0 %v1225
    %v1284 = vpop.f32.mrf.mxu0
    %v1285 = vadd.f32 0.0, %v1284
    %1286 = vmatmul.f32.gmra.mxu0 %v1228
    %v1287 = vpop.f32.mrf.mxu0
    %v1288 = vadd.f32 0.0, %v1287
    %1289 = vmatmul.f32.gmra.mxu0 %v1231
    %v1290 = vpop.f32.mrf.mxu0
    %v1291 = vadd.f32 0.0, %v1290
    %1292 = vmatmul.f32.gmra.mxu0 %v1234
    %v1293 = vpop.f32.mrf.mxu0
    %v1294 = vadd.f32 0.0, %v1293
    %1295 = vmatmul.f32.gmra.mxu0 %v1237
    %v1296 = vpop.f32.mrf.mxu0
    %v1297 = vadd.f32 0.0, %v1296
    %1298 = vmatmul.f32.gmra.mxu0 %v1240
    %v1299 = vpop.f32.mrf.mxu0
    %v1300 = vadd.f32 0.0, %v1299
    %1301 = vmatmul.f32.gmra.mxu0 %v1243
    %v1302 = vpop.f32.mrf.mxu0
    %v1303 = vadd.f32 0.0, %v1302
    %1304 = vdwg.mxu0
    %v1306 = vperm.slane %v1263, 0
    %1308 = vmatpush.msra.mxu0 0.0
    %1309 = vmatpush.msra.mxu0 0.0
    %1310 = vmatpush.msra.mxu0 0.0
    %1311 = vmatpush.msra.mxu0 0.0
    %1312 = vmatpush.msra.mxu0 0.0
    %1313 = vmatpush.msra.mxu0 0.0
    %1314 = vmatpush.msra.mxu0 0.0
    %1315 = vmatpush.msra.mxu0 0.0
    %1316 = vmatpush.msra.mxu0 %v1303
    %1317 = vmatpush.msra.mxu0 %v1300
    %1318 = vmatpush.msra.mxu0 %v1297
    %1319 = vmatpush.msra.mxu0 %v1294
    %1320 = vmatpush.msra.mxu0 %v1291
    %1321 = vmatpush.msra.mxu0 %v1288
    %1322 = vmatpush.msra.mxu0 %v1285
    %1323 = vmatpush.msra.mxu0 %v1282
    %1324 = vmatmul.f32.gmra.mxu0 %v240
    %v1325 = vpop.f32.mrf.mxu0
    %v1326 = vadd.f32 %v1306, %v1325
    %1327 = vmatmul.f32.gmra.mxu0 %v243
    %v1328 = vpop.f32.mrf.mxu0
    %v1329 = vadd.f32 %v1306, %v1328
    %1330 = vmatmul.f32.gmra.mxu0 %v246
    %v1331 = vpop.f32.mrf.mxu0
    %v1332 = vadd.f32 %v1306, %v1331
    %1333 = vmatmul.f32.gmra.mxu0 %v249
    %v1334 = vpop.f32.mrf.mxu0
    %v1335 = vadd.f32 %v1306, %v1334
    %1336 = vmatmul.f32.gmra.mxu0 %v252
    %v1337 = vpop.f32.mrf.mxu0
    %v1338 = vadd.f32 %v1306, %v1337
    %1339 = vmatmul.f32.gmra.mxu0 %v255
    %v1340 = vpop.f32.mrf.mxu0
    %v1341 = vadd.f32 %v1306, %v1340
    %1342 = vmatmul.f32.gmra.mxu0 %v258
    %v1343 = vpop.f32.mrf.mxu0
    %v1344 = vadd.f32 %v1306, %v1343
    %1345 = vmatmul.f32.gmra.mxu0 %v261
    %v1346 = vpop.f32.mrf.mxu0
    %v1347 = vadd.f32 %v1306, %v1346
    %1348 = vdwg.mxu0
    %v1349 = vadd.f32 %v1326, %v1329
    %v1350 = vadd.f32 %v1349, %v1332
    %v1351 = vadd.f32 %v1350, %v1335
    %v1352 = vadd.f32 %v1351, %v1338
    %v1353 = vadd.f32 %v1352, %v1341
    %v1354 = vadd.f32 %v1353, %v1344
    %v1355 = vadd.f32 %v1354, %v1347
    %v1356 = vrot.slane %v1355, 4
    %v1357 = vadd.f32 %v1355, %v1356
    %v1358 = vrot.slane %v1357, 2
    %v1359 = vadd.f32 %v1357, %v1358
    %v1360 = vrot.slane %v1359, 1
    %v1361 = vadd.f32 %v1359, %v1360
    %v1362 = vmul.f32 %v1361, %v323
    %v1363 = vsub.f32 %v1326, %v1362
    %v1364 = vsub.f32 %v1329, %v1362
    %v1365 = vsub.f32 %v1332, %v1362
    %v1366 = vsub.f32 %v1335, %v1362
    %v1367 = vsub.f32 %v1338, %v1362
    %v1368 = vsub.f32 %v1341, %v1362
    %v1369 = vsub.f32 %v1344, %v1362
    %v1370 = vsub.f32 %v1347, %v1362
    %v1371 = vmul.f32 %v1363, %v1363
    %v1372 = vmul.f32 %v1364, %v1364
    %v1373 = vmul.f32 %v1365, %v1365
    %v1374 = vmul.f32 %v1366, %v1366
    %v1375 = vmul.f32 %v1367, %v1367
    %v1376 = vmul.f32 %v1368, %v1368
    %v1377 = vmul.f32 %v1369, %v1369
    %v1378 = vmul.f32 %v1370, %v1370
    %v1379 = vadd.f32 %v1371, %v1372
    %v1380 = vadd.f32 %v1379, %v1373
    %v1381 = vadd.f32 %v1380, %v1374
    %v1382 = vadd.f32 %v1381, %v1375
    %v1383 = vadd.f32 %v1382, %v1376
    %v1384 = vadd.f32 %v1383, %v1377
    %v1385 = vadd.f32 %v1384, %v1378
    %v1386 = vrot.slane %v1385, 4
    %v1387 = vadd.f32 %v1385, %v1386
    %v1388 = vrot.slane %v1387, 2
    %v1389 = vadd.f32 %v1387, %v1388
    %v1390 = vrot.slane %v1389, 1
    %v1391 = vadd.f32 %v1389, %v1390
    %v1392 = vmul.f32 %v1391, %v323
    %v1393 = vadd.f32 %v1392, 1e-05
    %v1394 = vrsqrt.pop %v1393
    %v1395 = vmul.f32 %v1394, %v1393
    %v1396 = vmul.f32 %v1395, %v1394
    %v1397 = vmul.f32 0.5, %v1396
    %v1398 = vsub.f32 1.5, %v1397
    %v1399 = vmul.f32 %v1394, %v1398
    %vm1400 = vweird.f32 %v1393
    %vm1401 = vweird.f32 %v1394
    %vm1402 = vmor %vm1400, %vm1401
    %v1403 = vsel %vm1402, %v1394, %v1399
    %v1404 = vmul.f32 %v1363, %v1403
    %v1405 = vmul.f32 %v1364, %v1403
    %v1406 = vmul.f32 %v1365, %v1403
    %v1407 = vmul.f32 %v1366, %v1403
    %v1408 = vmul.f32 %v1367, %v1403
    %v1409 = vmul.f32 %v1368, %v1403
    %v1410 = vmul.f32 %v1369, %v1403
    %v1411 = vmul.f32 %v1370, %v1403
    %s1412 = scalar_lea.vmem %s4, 3
    %v1413 = vld [vmem:[%s1412] sm:$0x1]
    %v1415 = vperm.slane %v1413, 0
    %v1417 = vmul.f32 %v1404, %v1415
    %v1418 = vmul.f32 %v1405, %v1415
    %v1419 = vmul.f32 %v1406, %v1415
    %v1420 = vmul.f32 %v1407, %v1415
    %v1421 = vmul.f32 %v1408, %v1415
    %v1422 = vmul.f32 %v1409, %v1415
    %v1423 = vmul.f32 %v1410, %v1415
    %v1424 = vmul.f32 %v1411, %v1415
    %s1425 = scalar_lea.vmem [#allocation10], 3
    %v1426 = vld [vmem:[%s1425] sm:$0x1]
    %v1428 = vperm.slane %v1426, 0
    %v1430 = vadd.f32 %v1417, %v1428
    %v1431 = vadd.f32 %v1418, %v1428
    %v1432 = vadd.f32 %v1419, %v1428
    %v1433 = vadd.f32 %v1420, %v1428
    %v1434 = vadd.f32 %v1421, %v1428
    %v1435 = vadd.f32 %v1422, %v1428
    %v1436 = vadd.f32 %v1423, %v1428
    %v1437 = vadd.f32 %v1424, %v1428
    %s1438 = scalar_lea.vmem [#allocation11], 384
    %v1439 = vld [vmem:[%s1438] sm:$0xff]
    %v1440 = vld [vmem:[%s1438 + $0x8] sm:$0xff]
    %v1441 = vld [vmem:[%s1438 + $0x10] sm:$0xff]
    %v1442 = vld [vmem:[%s1438 + $0x18] sm:$0xff]
    %v1443 = vld [vmem:[%s1438 + $0x20] sm:$0xff]
    %v1444 = vld [vmem:[%s1438 + $0x28] sm:$0xff]
    %v1445 = vld [vmem:[%s1438 + $0x30] sm:$0xff]
    %v1446 = vld [vmem:[%s1438 + $0x38] sm:$0xff]
    %v1447 = vld [vmem:[%s1438 + $0x40] sm:$0xff]
    %v1448 = vld [vmem:[%s1438 + $0x48] sm:$0xff]
    %v1449 = vld [vmem:[%s1438 + $0x50] sm:$0xff]
    %v1450 = vld [vmem:[%s1438 + $0x58] sm:$0xff]
    %v1451 = vld [vmem:[%s1438 + $0x60] sm:$0xff]
    %v1452 = vld [vmem:[%s1438 + $0x68] sm:$0xff]
    %v1453 = vld [vmem:[%s1438 + $0x70] sm:$0xff]
    %v1454 = vld [vmem:[%s1438 + $0x78] sm:$0xff]
    %s1455 = scalar_lea.vmem [#allocation13], 3
    %v1456 = vld [vmem:[%s1455] sm:$0x1]
    %v1458 = vperm.slane %v1456, 0
    %1460 = vmatpush.msra.mxu0 %v1454
    %1461 = vmatpush.msra.mxu0 %v1453
    %1462 = vmatpush.msra.mxu0 %v1452
    %1463 = vmatpush.msra.mxu0 %v1451
    %1464 = vmatpush.msra.mxu0 %v1450
    %1465 = vmatpush.msra.mxu0 %v1449
    %1466 = vmatpush.msra.mxu0 %v1448
    %1467 = vmatpush.msra.mxu0 %v1447
    %1468 = vmatpush.msra.mxu0 %v1446
    %1469 = vmatpush.msra.mxu0 %v1445
    %1470 = vmatpush.msra.mxu0 %v1444
    %1471 = vmatpush.msra.mxu0 %v1443
    %1472 = vmatpush.msra.mxu0 %v1442
    %1473 = vmatpush.msra.mxu0 %v1441
    %1474 = vmatpush.msra.mxu0 %v1440
    %1475 = vmatpush.msra.mxu0 %v1439
    %1476 = vmatmul.f32.gmra.mxu0 %v1222
    %v1477 = vpop.f32.mrf.mxu0
    %v1478 = vadd.f32 %v1458, %v1477
    %1479 = vmatmul.f32.gmra.mxu0 %v1225
    %v1480 = vpop.f32.mrf.mxu0
    %v1481 = vadd.f32 %v1458, %v1480
    %1482 = vmatmul.f32.gmra.mxu0 %v1228
    %v1483 = vpop.f32.mrf.mxu0
    %v1484 = vadd.f32 %v1458, %v1483
    %1485 = vmatmul.f32.gmra.mxu0 %v1231
    %v1486 = vpop.f32.mrf.mxu0
    %v1487 = vadd.f32 %v1458, %v1486
    %1488 = vmatmul.f32.gmra.mxu0 %v1234
    %v1489 = vpop.f32.mrf.mxu0
    %v1490 = vadd.f32 %v1458, %v1489
    %1491 = vmatmul.f32.gmra.mxu0 %v1237
    %v1492 = vpop.f32.mrf.mxu0
    %v1493 = vadd.f32 %v1458, %v1492
    %1494 = vmatmul.f32.gmra.mxu0 %v1240
    %v1495 = vpop.f32.mrf.mxu0
    %v1496 = vadd.f32 %v1458, %v1495
    %1497 = vmatmul.f32.gmra.mxu0 %v1243
    %v1498 = vpop.f32.mrf.mxu0
    %v1499 = vadd.f32 %v1458, %v1498
    %1500 = vdwg.mxu0
    %v1501 = vmax.f32 %v1430, 0.0
    %v1502 = vmax.f32 %v1431, 0.0
    %v1503 = vmax.f32 %v1432, 0.0
    %v1504 = vmax.f32 %v1433, 0.0
    %v1505 = vmax.f32 %v1434, 0.0
    %v1506 = vmax.f32 %v1435, 0.0
    %v1507 = vmax.f32 %v1436, 0.0
    %v1508 = vmax.f32 %v1437, 0.0
    %v1509 = vadd.f32 %v1501, %v1478
    %v1510 = vadd.f32 %v1502, %v1481
    %v1511 = vadd.f32 %v1503, %v1484
    %v1512 = vadd.f32 %v1504, %v1487
    %v1513 = vadd.f32 %v1505, %v1490
    %v1514 = vadd.f32 %v1506, %v1493
    %v1515 = vadd.f32 %v1507, %v1496
    %v1516 = vadd.f32 %v1508, %v1499
    %s1517 = scalar_lea.vmem [#allocation7], 512
    %v1518 = vld [vmem:[%s1517] sm:$0xff]
    %v1519 = vld [vmem:[%s1517 + $0x8] sm:$0xff]
    %v1520 = vld [vmem:[%s1517 + $0x10] sm:$0xff]
    %v1521 = vld [vmem:[%s1517 + $0x18] sm:$0xff]
    %v1522 = vld [vmem:[%s1517 + $0x20] sm:$0xff]
    %v1523 = vld [vmem:[%s1517 + $0x28] sm:$0xff]
    %v1524 = vld [vmem:[%s1517 + $0x30] sm:$0xff]
    %v1525 = vld [vmem:[%s1517 + $0x38] sm:$0xff]
    %v1526 = vld [vmem:[%s1517 + $0x40] sm:$0xff]
    %v1527 = vld [vmem:[%s1517 + $0x48] sm:$0xff]
    %v1528 = vld [vmem:[%s1517 + $0x50] sm:$0xff]
    %v1529 = vld [vmem:[%s1517 + $0x58] sm:$0xff]
    %v1530 = vld [vmem:[%s1517 + $0x60] sm:$0xff]
    %v1531 = vld [vmem:[%s1517 + $0x68] sm:$0xff]
    %v1532 = vld [vmem:[%s1517 + $0x70] sm:$0xff]
    %v1533 = vld [vmem:[%s1517 + $0x78] sm:$0xff]
    %s1534 = scalar_lea.vmem [#allocation8], 4
    %v1535 = vld [vmem:[%s1534] sm:$0x1]
    %1536 = vmatpush.msra.mxu0 %v1533
    %1537 = vmatpush.msra.mxu0 %v1532
    %1538 = vmatpush.msra.mxu0 %v1531
    %1539 = vmatpush.msra.mxu0 %v1530
    %1540 = vmatpush.msra.mxu0 %v1529
    %1541 = vmatpush.msra.mxu0 %v1528
    %1542 = vmatpush.msra.mxu0 %v1527
    %1543 = vmatpush.msra.mxu0 %v1526
    %1544 = vmatpush.msra.mxu0 %v1525
    %1545 = vmatpush.msra.mxu0 %v1524
    %1546 = vmatpush.msra.mxu0 %v1523
    %1547 = vmatpush.msra.mxu0 %v1522
    %1548 = vmatpush.msra.mxu0 %v1521
    %1549 = vmatpush.msra.mxu0 %v1520
    %1550 = vmatpush.msra.mxu0 %v1519
    %1551 = vmatpush.msra.mxu0 %v1518
    %1552 = vmatmul.f32.gmra.mxu0 %v1509
    %v1553 = vpop.f32.mrf.mxu0
    %v1554 = vadd.f32 0.0, %v1553
    %1555 = vmatmul.f32.gmra.mxu0 %v1510
    %v1556 = vpop.f32.mrf.mxu0
    %v1557 = vadd.f32 0.0, %v1556
    %1558 = vmatmul.f32.gmra.mxu0 %v1511
    %v1559 = vpop.f32.mrf.mxu0
    %v1560 = vadd.f32 0.0, %v1559
    %1561 = vmatmul.f32.gmra.mxu0 %v1512
    %v1562 = vpop.f32.mrf.mxu0
    %v1563 = vadd.f32 0.0, %v1562
    %1564 = vmatmul.f32.gmra.mxu0 %v1513
    %v1565 = vpop.f32.mrf.mxu0
    %v1566 = vadd.f32 0.0, %v1565
    %1567 = vmatmul.f32.gmra.mxu0 %v1514
    %v1568 = vpop.f32.mrf.mxu0
    %v1569 = vadd.f32 0.0, %v1568
    %1570 = vmatmul.f32.gmra.mxu0 %v1515
    %v1571 = vpop.f32.mrf.mxu0
    %v1572 = vadd.f32 0.0, %v1571
    %1573 = vmatmul.f32.gmra.mxu0 %v1516
    %v1574 = vpop.f32.mrf.mxu0
    %v1575 = vadd.f32 0.0, %v1574
    %1576 = vdwg.mxu0
    %v1578 = vperm.slane %v1535, 0
    %1580 = vmatpush.msra.mxu0 0.0
    %1581 = vmatpush.msra.mxu0 0.0
    %1582 = vmatpush.msra.mxu0 0.0
    %1583 = vmatpush.msra.mxu0 0.0
    %1584 = vmatpush.msra.mxu0 0.0
    %1585 = vmatpush.msra.mxu0 0.0
    %1586 = vmatpush.msra.mxu0 0.0
    %1587 = vmatpush.msra.mxu0 0.0
    %1588 = vmatpush.msra.mxu0 %v1575
    %1589 = vmatpush.msra.mxu0 %v1572
    %1590 = vmatpush.msra.mxu0 %v1569
    %1591 = vmatpush.msra.mxu0 %v1566
    %1592 = vmatpush.msra.mxu0 %v1563
    %1593 = vmatpush.msra.mxu0 %v1560
    %1594 = vmatpush.msra.mxu0 %v1557
    %1595 = vmatpush.msra.mxu0 %v1554
    %1596 = vmatmul.f32.gmra.mxu0 %v240
    %v1597 = vpop.f32.mrf.mxu0
    %v1598 = vadd.f32 %v1578, %v1597
    %1599 = vmatmul.f32.gmra.mxu0 %v243
    %v1600 = vpop.f32.mrf.mxu0
    %v1601 = vadd.f32 %v1578, %v1600
    %1602 = vmatmul.f32.gmra.mxu0 %v246
    %v1603 = vpop.f32.mrf.mxu0
    %v1604 = vadd.f32 %v1578, %v1603
    %1605 = vmatmul.f32.gmra.mxu0 %v249
    %v1606 = vpop.f32.mrf.mxu0
    %v1607 = vadd.f32 %v1578, %v1606
    %1608 = vmatmul.f32.gmra.mxu0 %v252
    %v1609 = vpop.f32.mrf.mxu0
    %v1610 = vadd.f32 %v1578, %v1609
    %1611 = vmatmul.f32.gmra.mxu0 %v255
    %v1612 = vpop.f32.mrf.mxu0
    %v1613 = vadd.f32 %v1578, %v1612
    %1614 = vmatmul.f32.gmra.mxu0 %v258
    %v1615 = vpop.f32.mrf.mxu0
    %v1616 = vadd.f32 %v1578, %v1615
    %1617 = vmatmul.f32.gmra.mxu0 %v261
    %v1618 = vpop.f32.mrf.mxu0
    %v1619 = vadd.f32 %v1578, %v1618
    %1620 = vdwg.mxu0
    %v1621 = vadd.f32 %v1598, %v1601
    %v1622 = vadd.f32 %v1621, %v1604
    %v1623 = vadd.f32 %v1622, %v1607
    %v1624 = vadd.f32 %v1623, %v1610
    %v1625 = vadd.f32 %v1624, %v1613
    %v1626 = vadd.f32 %v1625, %v1616
    %v1627 = vadd.f32 %v1626, %v1619
    %v1628 = vrot.slane %v1627, 4
    %v1629 = vadd.f32 %v1627, %v1628
    %v1630 = vrot.slane %v1629, 2
    %v1631 = vadd.f32 %v1629, %v1630
    %v1632 = vrot.slane %v1631, 1
    %v1633 = vadd.f32 %v1631, %v1632
    %v1634 = vmul.f32 %v1633, %v323
    %v1635 = vsub.f32 %v1598, %v1634
    %v1636 = vsub.f32 %v1601, %v1634
    %v1637 = vsub.f32 %v1604, %v1634
    %v1638 = vsub.f32 %v1607, %v1634
    %v1639 = vsub.f32 %v1610, %v1634
    %v1640 = vsub.f32 %v1613, %v1634
    %v1641 = vsub.f32 %v1616, %v1634
    %v1642 = vsub.f32 %v1619, %v1634
    %v1643 = vmul.f32 %v1635, %v1635
    %v1644 = vmul.f32 %v1636, %v1636
    %v1645 = vmul.f32 %v1637, %v1637
    %v1646 = vmul.f32 %v1638, %v1638
    %v1647 = vmul.f32 %v1639, %v1639
    %v1648 = vmul.f32 %v1640, %v1640
    %v1649 = vmul.f32 %v1641, %v1641
    %v1650 = vmul.f32 %v1642, %v1642
    %v1651 = vadd.f32 %v1643, %v1644
    %v1652 = vadd.f32 %v1651, %v1645
    %v1653 = vadd.f32 %v1652, %v1646
    %v1654 = vadd.f32 %v1653, %v1647
    %v1655 = vadd.f32 %v1654, %v1648
    %v1656 = vadd.f32 %v1655, %v1649
    %v1657 = vadd.f32 %v1656, %v1650
    %v1658 = vrot.slane %v1657, 4
    %v1659 = vadd.f32 %v1657, %v1658
    %v1660 = vrot.slane %v1659, 2
    %v1661 = vadd.f32 %v1659, %v1660
    %v1662 = vrot.slane %v1661, 1
    %v1663 = vadd.f32 %v1661, %v1662
    %v1664 = vmul.f32 %v1663, %v323
    %v1665 = vadd.f32 %v1664, 1e-05
    %v1666 = vrsqrt.pop %v1665
    %v1667 = vmul.f32 %v1666, %v1665
    %v1668 = vmul.f32 %v1667, %v1666
    %v1669 = vmul.f32 0.5, %v1668
    %v1670 = vsub.f32 1.5, %v1669
    %v1671 = vmul.f32 %v1666, %v1670
    %vm1672 = vweird.f32 %v1665
    %vm1673 = vweird.f32 %v1666
    %vm1674 = vmor %vm1672, %vm1673
    %v1675 = vsel %vm1674, %v1666, %v1671
    %v1676 = vmul.f32 %v1635, %v1675
    %v1677 = vmul.f32 %v1636, %v1675
    %v1678 = vmul.f32 %v1637, %v1675
    %v1679 = vmul.f32 %v1638, %v1675
    %v1680 = vmul.f32 %v1639, %v1675
    %v1681 = vmul.f32 %v1640, %v1675
    %v1682 = vmul.f32 %v1641, %v1675
    %v1683 = vmul.f32 %v1642, %v1675
    %s1684 = scalar_lea.vmem %s4, 4
    %v1685 = vld [vmem:[%s1684] sm:$0x1]
    %v1687 = vperm.slane %v1685, 0
    %v1689 = vmul.f32 %v1676, %v1687
    %v1690 = vmul.f32 %v1677, %v1687
    %v1691 = vmul.f32 %v1678, %v1687
    %v1692 = vmul.f32 %v1679, %v1687
    %v1693 = vmul.f32 %v1680, %v1687
    %v1694 = vmul.f32 %v1681, %v1687
    %v1695 = vmul.f32 %v1682, %v1687
    %v1696 = vmul.f32 %v1683, %v1687
    %s1697 = scalar_lea.vmem [#allocation10], 4
    %v1698 = vld [vmem:[%s1697] sm:$0x1]
    %v1700 = vperm.slane %v1698, 0
    %v1702 = vadd.f32 %v1689, %v1700
    %v1703 = vadd.f32 %v1690, %v1700
    %v1704 = vadd.f32 %v1691, %v1700
    %v1705 = vadd.f32 %v1692, %v1700
    %v1706 = vadd.f32 %v1693, %v1700
    %v1707 = vadd.f32 %v1694, %v1700
    %v1708 = vadd.f32 %v1695, %v1700
    %v1709 = vadd.f32 %v1696, %v1700
    %s1710 = scalar_lea.vmem [#allocation11], 512
    %v1711 = vld [vmem:[%s1710] sm:$0xff]
    %v1712 = vld [vmem:[%s1710 + $0x8] sm:$0xff]
    %v1713 = vld [vmem:[%s1710 + $0x10] sm:$0xff]
    %v1714 = vld [vmem:[%s1710 + $0x18] sm:$0xff]
    %v1715 = vld [vmem:[%s1710 + $0x20] sm:$0xff]
    %v1716 = vld [vmem:[%s1710 + $0x28] sm:$0xff]
    %v1717 = vld [vmem:[%s1710 + $0x30] sm:$0xff]
    %v1718 = vld [vmem:[%s1710 + $0x38] sm:$0xff]
    %v1719 = vld [vmem:[%s1710 + $0x40] sm:$0xff]
    %v1720 = vld [vmem:[%s1710 + $0x48] sm:$0xff]
    %v1721 = vld [vmem:[%s1710 + $0x50] sm:$0xff]
    %v1722 = vld [vmem:[%s1710 + $0x58] sm:$0xff]
    %v1723 = vld [vmem:[%s1710 + $0x60] sm:$0xff]
    %v1724 = vld [vmem:[%s1710 + $0x68] sm:$0xff]
    %v1725 = vld [vmem:[%s1710 + $0x70] sm:$0xff]
    %v1726 = vld [vmem:[%s1710 + $0x78] sm:$0xff]
    %s1727 = scalar_lea.vmem [#allocation13], 4
    %v1728 = vld [vmem:[%s1727] sm:$0x1]
    %v1730 = vperm.slane %v1728, 0
    %1732 = vmatpush.msra.mxu0 %v1726
    %1733 = vmatpush.msra.mxu0 %v1725
    %1734 = vmatpush.msra.mxu0 %v1724
    %1735 = vmatpush.msra.mxu0 %v1723
    %1736 = vmatpush.msra.mxu0 %v1722
    %1737 = vmatpush.msra.mxu0 %v1721
    %1738 = vmatpush.msra.mxu0 %v1720
    %1739 = vmatpush.msra.mxu0 %v1719
    %1740 = vmatpush.msra.mxu0 %v1718
    %1741 = vmatpush.msra.mxu0 %v1717
    %1742 = vmatpush.msra.mxu0 %v1716
    %1743 = vmatpush.msra.mxu0 %v1715
    %1744 = vmatpush.msra.mxu0 %v1714
    %1745 = vmatpush.msra.mxu0 %v1713
    %1746 = vmatpush.msra.mxu0 %v1712
    %1747 = vmatpush.msra.mxu0 %v1711
    %1748 = vmatmul.f32.gmra.mxu0 %v1509
    %v1749 = vpop.f32.mrf.mxu0
    %v1750 = vadd.f32 %v1730, %v1749
    %1751 = vmatmul.f32.gmra.mxu0 %v1510
    %v1752 = vpop.f32.mrf.mxu0
    %v1753 = vadd.f32 %v1730, %v1752
    %1754 = vmatmul.f32.gmra.mxu0 %v1511
    %v1755 = vpop.f32.mrf.mxu0
    %v1756 = vadd.f32 %v1730, %v1755
    %1757 = vmatmul.f32.gmra.mxu0 %v1512
    %v1758 = vpop.f32.mrf.mxu0
    %v1759 = vadd.f32 %v1730, %v1758
    %1760 = vmatmul.f32.gmra.mxu0 %v1513
    %v1761 = vpop.f32.mrf.mxu0
    %v1762 = vadd.f32 %v1730, %v1761
    %1763 = vmatmul.f32.gmra.mxu0 %v1514
    %v1764 = vpop.f32.mrf.mxu0
    %v1765 = vadd.f32 %v1730, %v1764
    %1766 = vmatmul.f32.gmra.mxu0 %v1515
    %v1767 = vpop.f32.mrf.mxu0
    %v1768 = vadd.f32 %v1730, %v1767
    %1769 = vmatmul.f32.gmra.mxu0 %v1516
    %v1770 = vpop.f32.mrf.mxu0
    %v1771 = vadd.f32 %v1730, %v1770
    %1772 = vdwg.mxu0
    %v1773 = vmax.f32 %v1702, 0.0
    %v1774 = vmax.f32 %v1703, 0.0
    %v1775 = vmax.f32 %v1704, 0.0
    %v1776 = vmax.f32 %v1705, 0.0
    %v1777 = vmax.f32 %v1706, 0.0
    %v1778 = vmax.f32 %v1707, 0.0
    %v1779 = vmax.f32 %v1708, 0.0
    %v1780 = vmax.f32 %v1709, 0.0
    %v1781 = vadd.f32 %v1773, %v1750
    %v1782 = vadd.f32 %v1774, %v1753
    %v1783 = vadd.f32 %v1775, %v1756
    %v1784 = vadd.f32 %v1776, %v1759
    %v1785 = vadd.f32 %v1777, %v1762
    %v1786 = vadd.f32 %v1778, %v1765
    %v1787 = vadd.f32 %v1779, %v1768
    %v1788 = vadd.f32 %v1780, %v1771
    %s1789 = scalar_lea.vmem [#allocation7], 640
    %v1790 = vld [vmem:[%s1789] sm:$0xff]
    %v1791 = vld [vmem:[%s1789 + $0x8] sm:$0xff]
    %v1792 = vld [vmem:[%s1789 + $0x10] sm:$0xff]
    %v1793 = vld [vmem:[%s1789 + $0x18] sm:$0xff]
    %v1794 = vld [vmem:[%s1789 + $0x20] sm:$0xff]
    %v1795 = vld [vmem:[%s1789 + $0x28] sm:$0xff]
    %v1796 = vld [vmem:[%s1789 + $0x30] sm:$0xff]
    %v1797 = vld [vmem:[%s1789 + $0x38] sm:$0xff]
    %v1798 = vld [vmem:[%s1789 + $0x40] sm:$0xff]
    %v1799 = vld [vmem:[%s1789 + $0x48] sm:$0xff]
    %v1800 = vld [vmem:[%s1789 + $0x50] sm:$0xff]
    %v1801 = vld [vmem:[%s1789 + $0x58] sm:$0xff]
    %v1802 = vld [vmem:[%s1789 + $0x60] sm:$0xff]
    %v1803 = vld [vmem:[%s1789 + $0x68] sm:$0xff]
    %v1804 = vld [vmem:[%s1789 + $0x70] sm:$0xff]
    %v1805 = vld [vmem:[%s1789 + $0x78] sm:$0xff]
    %s1806 = scalar_lea.vmem [#allocation8], 5
    %v1807 = vld [vmem:[%s1806] sm:$0x1]
    %1808 = vmatpush.msra.mxu0 %v1805
    %1809 = vmatpush.msra.mxu0 %v1804
    %1810 = vmatpush.msra.mxu0 %v1803
    %1811 = vmatpush.msra.mxu0 %v1802
    %1812 = vmatpush.msra.mxu0 %v1801
    %1813 = vmatpush.msra.mxu0 %v1800
    %1814 = vmatpush.msra.mxu0 %v1799
    %1815 = vmatpush.msra.mxu0 %v1798
    %1816 = vmatpush.msra.mxu0 %v1797
    %1817 = vmatpush.msra.mxu0 %v1796
    %1818 = vmatpush.msra.mxu0 %v1795
    %1819 = vmatpush.msra.mxu0 %v1794
    %1820 = vmatpush.msra.mxu0 %v1793
    %1821 = vmatpush.msra.mxu0 %v1792
    %1822 = vmatpush.msra.mxu0 %v1791
    %1823 = vmatpush.msra.mxu0 %v1790
    %1824 = vmatmul.f32.gmra.mxu0 %v1781
    %v1825 = vpop.f32.mrf.mxu0
    %v1826 = vadd.f32 0.0, %v1825
    %1827 = vmatmul.f32.gmra.mxu0 %v1782
    %v1828 = vpop.f32.mrf.mxu0
    %v1829 = vadd.f32 0.0, %v1828
    %1830 = vmatmul.f32.gmra.mxu0 %v1783
    %v1831 = vpop.f32.mrf.mxu0
    %v1832 = vadd.f32 0.0, %v1831
    %1833 = vmatmul.f32.gmra.mxu0 %v1784
    %v1834 = vpop.f32.mrf.mxu0
    %v1835 = vadd.f32 0.0, %v1834
    %1836 = vmatmul.f32.gmra.mxu0 %v1785
    %v1837 = vpop.f32.mrf.mxu0
    %v1838 = vadd.f32 0.0, %v1837
    %1839 = vmatmul.f32.gmra.mxu0 %v1786
    %v1840 = vpop.f32.mrf.mxu0
    %v1841 = vadd.f32 0.0, %v1840
    %1842 = vmatmul.f32.gmra.mxu0 %v1787
    %v1843 = vpop.f32.mrf.mxu0
    %v1844 = vadd.f32 0.0, %v1843
    %1845 = vmatmul.f32.gmra.mxu0 %v1788
    %v1846 = vpop.f32.mrf.mxu0
    %v1847 = vadd.f32 0.0, %v1846
    %1848 = vdwg.mxu0
    %v1850 = vperm.slane %v1807, 0
    %1852 = vmatpush.msra.mxu0 0.0
    %1853 = vmatpush.msra.mxu0 0.0
    %1854 = vmatpush.msra.mxu0 0.0
    %1855 = vmatpush.msra.mxu0 0.0
    %1856 = vmatpush.msra.mxu0 0.0
    %1857 = vmatpush.msra.mxu0 0.0
    %1858 = vmatpush.msra.mxu0 0.0
    %1859 = vmatpush.msra.mxu0 0.0
    %1860 = vmatpush.msra.mxu0 %v1847
    %1861 = vmatpush.msra.mxu0 %v1844
    %1862 = vmatpush.msra.mxu0 %v1841
    %1863 = vmatpush.msra.mxu0 %v1838
    %1864 = vmatpush.msra.mxu0 %v1835
    %1865 = vmatpush.msra.mxu0 %v1832
    %1866 = vmatpush.msra.mxu0 %v1829
    %1867 = vmatpush.msra.mxu0 %v1826
    %1868 = vmatmul.f32.gmra.mxu0 %v240
    %v1869 = vpop.f32.mrf.mxu0
    %v1870 = vadd.f32 %v1850, %v1869
    %1871 = vmatmul.f32.gmra.mxu0 %v243
    %v1872 = vpop.f32.mrf.mxu0
    %v1873 = vadd.f32 %v1850, %v1872
    %1874 = vmatmul.f32.gmra.mxu0 %v246
    %v1875 = vpop.f32.mrf.mxu0
    %v1876 = vadd.f32 %v1850, %v1875
    %1877 = vmatmul.f32.gmra.mxu0 %v249
    %v1878 = vpop.f32.mrf.mxu0
    %v1879 = vadd.f32 %v1850, %v1878
    %1880 = vmatmul.f32.gmra.mxu0 %v252
    %v1881 = vpop.f32.mrf.mxu0
    %v1882 = vadd.f32 %v1850, %v1881
    %1883 = vmatmul.f32.gmra.mxu0 %v255
    %v1884 = vpop.f32.mrf.mxu0
    %v1885 = vadd.f32 %v1850, %v1884
    %1886 = vmatmul.f32.gmra.mxu0 %v258
    %v1887 = vpop.f32.mrf.mxu0
    %v1888 = vadd.f32 %v1850, %v1887
    %1889 = vmatmul.f32.gmra.mxu0 %v261
    %v1890 = vpop.f32.mrf.mxu0
    %v1891 = vadd.f32 %v1850, %v1890
    %1892 = vdwg.mxu0
    %v1893 = vadd.f32 %v1870, %v1873
    %v1894 = vadd.f32 %v1893, %v1876
    %v1895 = vadd.f32 %v1894, %v1879
    %v1896 = vadd.f32 %v1895, %v1882
    %v1897 = vadd.f32 %v1896, %v1885
    %v1898 = vadd.f32 %v1897, %v1888
    %v1899 = vadd.f32 %v1898, %v1891
    %v1900 = vrot.slane %v1899, 4
    %v1901 = vadd.f32 %v1899, %v1900
    %v1902 = vrot.slane %v1901, 2
    %v1903 = vadd.f32 %v1901, %v1902
    %v1904 = vrot.slane %v1903, 1
    %v1905 = vadd.f32 %v1903, %v1904
    %v1906 = vmul.f32 %v1905, %v323
    %v1907 = vsub.f32 %v1870, %v1906
    %v1908 = vsub.f32 %v1873, %v1906
    %v1909 = vsub.f32 %v1876, %v1906
    %v1910 = vsub.f32 %v1879, %v1906
    %v1911 = vsub.f32 %v1882, %v1906
    %v1912 = vsub.f32 %v1885, %v1906
    %v1913 = vsub.f32 %v1888, %v1906
    %v1914 = vsub.f32 %v1891, %v1906
    %v1915 = vmul.f32 %v1907, %v1907
    %v1916 = vmul.f32 %v1908, %v1908
    %v1917 = vmul.f32 %v1909, %v1909
    %v1918 = vmul.f32 %v1910, %v1910
    %v1919 = vmul.f32 %v1911, %v1911
    %v1920 = vmul.f32 %v1912, %v1912
    %v1921 = vmul.f32 %v1913, %v1913
    %v1922 = vmul.f32 %v1914, %v1914
    %v1923 = vadd.f32 %v1915, %v1916
    %v1924 = vadd.f32 %v1923, %v1917
    %v1925 = vadd.f32 %v1924, %v1918
    %v1926 = vadd.f32 %v1925, %v1919
    %v1927 = vadd.f32 %v1926, %v1920
    %v1928 = vadd.f32 %v1927, %v1921
    %v1929 = vadd.f32 %v1928, %v1922
    %v1930 = vrot.slane %v1929, 4
    %v1931 = vadd.f32 %v1929, %v1930
    %v1932 = vrot.slane %v1931, 2
    %v1933 = vadd.f32 %v1931, %v1932
    %v1934 = vrot.slane %v1933, 1
    %v1935 = vadd.f32 %v1933, %v1934
    %v1936 = vmul.f32 %v1935, %v323
    %v1937 = vadd.f32 %v1936, 1e-05
    %v1938 = vrsqrt.pop %v1937
    %v1939 = vmul.f32 %v1938, %v1937
    %v1940 = vmul.f32 %v1939, %v1938
    %v1941 = vmul.f32 0.5, %v1940
    %v1942 = vsub.f32 1.5, %v1941
    %v1943 = vmul.f32 %v1938, %v1942
    %vm1944 = vweird.f32 %v1937
    %vm1945 = vweird.f32 %v1938
    %vm1946 = vmor %vm1944, %vm1945
    %v1947 = vsel %vm1946, %v1938, %v1943
    %v1948 = vmul.f32 %v1907, %v1947
    %v1949 = vmul.f32 %v1908, %v1947
    %v1950 = vmul.f32 %v1909, %v1947
    %v1951 = vmul.f32 %v1910, %v1947
    %v1952 = vmul.f32 %v1911, %v1947
    %v1953 = vmul.f32 %v1912, %v1947
    %v1954 = vmul.f32 %v1913, %v1947
    %v1955 = vmul.f32 %v1914, %v1947
    %s1956 = scalar_lea.vmem %s4, 5
    %v1957 = vld [vmem:[%s1956] sm:$0x1]
    %v1959 = vperm.slane %v1957, 0
    %v1961 = vmul.f32 %v1948, %v1959
    %v1962 = vmul.f32 %v1949, %v1959
    %v1963 = vmul.f32 %v1950, %v1959
    %v1964 = vmul.f32 %v1951, %v1959
    %v1965 = vmul.f32 %v1952, %v1959
    %v1966 = vmul.f32 %v1953, %v1959
    %v1967 = vmul.f32 %v1954, %v1959
    %v1968 = vmul.f32 %v1955, %v1959
    %s1969 = scalar_lea.vmem [#allocation10], 5
    %v1970 = vld [vmem:[%s1969] sm:$0x1]
    %v1972 = vperm.slane %v1970, 0
    %v1974 = vadd.f32 %v1961, %v1972
    %v1975 = vadd.f32 %v1962, %v1972
    %v1976 = vadd.f32 %v1963, %v1972
    %v1977 = vadd.f32 %v1964, %v1972
    %v1978 = vadd.f32 %v1965, %v1972
    %v1979 = vadd.f32 %v1966, %v1972
    %v1980 = vadd.f32 %v1967, %v1972
    %v1981 = vadd.f32 %v1968, %v1972
    %s1982 = scalar_lea.vmem [#allocation11], 640
    %v1983 = vld [vmem:[%s1982] sm:$0xff]
    %v1984 = vld [vmem:[%s1982 + $0x8] sm:$0xff]
    %v1985 = vld [vmem:[%s1982 + $0x10] sm:$0xff]
    %v1986 = vld [vmem:[%s1982 + $0x18] sm:$0xff]
    %v1987 = vld [vmem:[%s1982 + $0x20] sm:$0xff]
    %v1988 = vld [vmem:[%s1982 + $0x28] sm:$0xff]
    %v1989 = vld [vmem:[%s1982 + $0x30] sm:$0xff]
    %v1990 = vld [vmem:[%s1982 + $0x38] sm:$0xff]
    %v1991 = vld [vmem:[%s1982 + $0x40] sm:$0xff]
    %v1992 = vld [vmem:[%s1982 + $0x48] sm:$0xff]
    %v1993 = vld [vmem:[%s1982 + $0x50] sm:$0xff]
    %v1994 = vld [vmem:[%s1982 + $0x58] sm:$0xff]
    %v1995 = vld [vmem:[%s1982 + $0x60] sm:$0xff]
    %v1996 = vld [vmem:[%s1982 + $0x68] sm:$0xff]
    %v1997 = vld [vmem:[%s1982 + $0x70] sm:$0xff]
    %v1998 = vld [vmem:[%s1982 + $0x78] sm:$0xff]
    %s1999 = scalar_lea.vmem [#allocation13], 5
    %v2000 = vld [vmem:[%s1999] sm:$0x1]
    %v2002 = vperm.slane %v2000, 0
    %2004 = vmatpush.msra.mxu0 %v1998
    %2005 = vmatpush.msra.mxu0 %v1997
    %2006 = vmatpush.msra.mxu0 %v1996
    %2007 = vmatpush.msra.mxu0 %v1995
    %2008 = vmatpush.msra.mxu0 %v1994
    %2009 = vmatpush.msra.mxu0 %v1993
    %2010 = vmatpush.msra.mxu0 %v1992
    %2011 = vmatpush.msra.mxu0 %v1991
    %2012 = vmatpush.msra.mxu0 %v1990
    %2013 = vmatpush.msra.mxu0 %v1989
    %2014 = vmatpush.msra.mxu0 %v1988
    %2015 = vmatpush.msra.mxu0 %v1987
    %2016 = vmatpush.msra.mxu0 %v1986
    %2017 = vmatpush.msra.mxu0 %v1985
    %2018 = vmatpush.msra.mxu0 %v1984
    %2019 = vmatpush.msra.mxu0 %v1983
    %2020 = vmatmul.f32.gmra.mxu0 %v1781
    %v2021 = vpop.f32.mrf.mxu0
    %v2022 = vadd.f32 %v2002, %v2021
    %2023 = vmatmul.f32.gmra.mxu0 %v1782
    %v2024 = vpop.f32.mrf.mxu0
    %v2025 = vadd.f32 %v2002, %v2024
    %2026 = vmatmul.f32.gmra.mxu0 %v1783
    %v2027 = vpop.f32.mrf.mxu0
    %v2028 = vadd.f32 %v2002, %v2027
    %2029 = vmatmul.f32.gmra.mxu0 %v1784
    %v2030 = vpop.f32.mrf.mxu0
    %v2031 = vadd.f32 %v2002, %v2030
    %2032 = vmatmul.f32.gmra.mxu0 %v1785
    %v2033 = vpop.f32.mrf.mxu0
    %v2034 = vadd.f32 %v2002, %v2033
    %2035 = vmatmul.f32.gmra.mxu0 %v1786
    %v2036 = vpop.f32.mrf.mxu0
    %v2037 = vadd.f32 %v2002, %v2036
    %2038 = vmatmul.f32.gmra.mxu0 %v1787
    %v2039 = vpop.f32.mrf.mxu0
    %v2040 = vadd.f32 %v2002, %v2039
    %2041 = vmatmul.f32.gmra.mxu0 %v1788
    %v2042 = vpop.f32.mrf.mxu0
    %v2043 = vadd.f32 %v2002, %v2042
    %2044 = vdwg.mxu0
    %v2045 = vmax.f32 %v1974, 0.0
    %v2046 = vmax.f32 %v1975, 0.0
    %v2047 = vmax.f32 %v1976, 0.0
    %v2048 = vmax.f32 %v1977, 0.0
    %v2049 = vmax.f32 %v1978, 0.0
    %v2050 = vmax.f32 %v1979, 0.0
    %v2051 = vmax.f32 %v1980, 0.0
    %v2052 = vmax.f32 %v1981, 0.0
    %v2053 = vadd.f32 %v2045, %v2022
    %v2054 = vadd.f32 %v2046, %v2025
    %v2055 = vadd.f32 %v2047, %v2028
    %v2056 = vadd.f32 %v2048, %v2031
    %v2057 = vadd.f32 %v2049, %v2034
    %v2058 = vadd.f32 %v2050, %v2037
    %v2059 = vadd.f32 %v2051, %v2040
    %v2060 = vadd.f32 %v2052, %v2043
    %2061 = vst [vmem:[#allocation16] sm:$0xff] %v2053
    %2062 = vst [vmem:[#allocation16 + $0x8] sm:$0xff] %v2054
    %2063 = vst [vmem:[#allocation16 + $0x10] sm:$0xff] %v2055
    %2064 = vst [vmem:[#allocation16 + $0x18] sm:$0xff] %v2056
    %2065 = vst [vmem:[#allocation16 + $0x20] sm:$0xff] %v2057
    %2066 = vst [vmem:[#allocation16 + $0x28] sm:$0xff] %v2058
    %2067 = vst [vmem:[#allocation16 + $0x30] sm:$0xff] %v2059
    %2068 = vst [vmem:[#allocation16 + $0x38] sm:$0xff] %v2060
    // Predicated region
    $region74: #{_lambda_.1} parent=1 // pred_check
      _
    $region75: #{_lambda_.1} parent=1 // pred_check_branch
      %2070 = sbr.rel (0) target = $region77
    $region76: #{_lambda_.1} parent=1 // pred_region
      %2072 = vsyncadd [#allocation4], 0
      %s2073 = sshll.u32 [#allocation16], 4
      %s2074 = int_to_ptr.vmem [resolvable:$true] %s2073
      %s2075 = sshll.u32 %s10, 4
      %s2076 = int_to_ptr.hbm [resolvable:$true] %s2075
      %2081 = dma.vmem_to_hbm [thread:$0]  %s2074, 1024, %s2076, [#allocation4], 128, 128, 8
    $region77: #{_lambda_.1} parent=1 // pred_fallthru
      _
    // Predicated region
    $region78: #{_lambda_.1} parent=1 // pred_check
      _
    $region79: #{_lambda_.1} parent=1 // pred_check_branch
      %2083 = sbr.rel (0) target = $region81
    $region80: #{_lambda_.1} parent=1 // pred_region
      %2085 = dma.done [#allocation4], 1024
    $region81: #{_lambda_.1} parent=1 // pred_fallthru
      _
    %2086 = vsyncpa [#allocation3], 1
    %2087 = vsyncpa [#allocation6], 1
    %2088 = vsyncpa [#allocation9], 1
    %2089 = vsyncpa [#allocation12], 1
    %2090 = vsyncpa [#allocation15], 1
    %2091 = vsyncpa [#allocation4], 1

</llo_original>
